<compile_context>
chip_gen: v7x
topology: tpu7x:2x2x1
jax: 0.10.0
libtpu: 0.0.40
codegen_flags: <defaults>
</compile_context>

<pallas_src>
import functools

import jax
import jax.numpy as jnp
from jax.experimental import pallas as pl
from jax.experimental.pallas import tpu as pltpu
import numpy as np


def _nonlocal_kernel(x_ref, w_qkv_ref, b_qkv_ref, w_W_ref, b_W_ref,
                     wy_ref, f_ref, *, H, W, Ci):
    """One image per grid step.

    x_ref    : (1, C, N)     N = H*W   (lane-dense last dim)
    w_qkv    : (3*Ci, C)     theta/phi/g 1x1-conv weights stacked
    b_qkv    : (3*Ci, 1)
    w_W      : (C, Ci)       W projection with eval-mode BN folded in
    b_W      : (C, 1)
    wy_ref   : (1, C, N)     -> W_y
    f_ref    : (1, Ci, W*W)  -> f_div_C (softmax attention map), lane-dense
    """
    N = H * W
    x = x_ref[0]                                                         # (C, N)

    # Fused theta/phi/g projection: a single MXU matmul, f32 accumulation.
    qkv = jnp.dot(w_qkv_ref[...], x,
                  preferred_element_type=jnp.float32) + b_qkv_ref[...]   # (3Ci, N)

    theta = qkv[0:Ci].reshape(Ci, H, W)
    phi = qkv[Ci:2 * Ci].reshape(Ci, H, W)
    g = qkv[2 * Ci:3 * Ci].reshape(Ci, H, W)

    # f[i, w1, w2] = sum_h theta[i, h, w1] * phi[i, h, w2]   (batched over Ci)
    f = jnp.einsum('ihw,ihv->iwv', theta, phi,
                   preferred_element_type=jnp.float32)                   # (Ci, W, W)

    # Softmax over last dim; reciprocal goes to the EUP (approx) to free VALU slots.
    f = f - jnp.max(f, axis=-1, keepdims=True)
    e = jnp.exp(f)
    f_div = e * pl.reciprocal(jnp.sum(e, axis=-1, keepdims=True), approx=True)

    # Single lane-dense store of the attention map (W*W >= 128 lanes).
    f_ref[0] = f_div.reshape(Ci, W * W).astype(f_ref.dtype)

    # y[i, h, w1] = sum_w2 g[i, h, w2] * f_div[i, w1, w2]   (batched over Ci,
    # natural dot_general output order -> no extra transpose)
    y = jnp.einsum('ihv,iwv->ihw', g, f_div,
                   preferred_element_type=jnp.float32)                   # (Ci, H, W)

    # Back to C channels; BatchNorm affine already folded into w_W / b_W.
    wy = jnp.dot(w_W_ref[...], y.reshape(Ci, N).astype(w_W_ref.dtype),
                 preferred_element_type=jnp.float32) + b_W_ref[...]      # (C, N)
    wy_ref[0] = wy.astype(wy_ref.dtype)


def non_local_block_2d(x, w_theta, b_theta, w_phi, b_phi, w_g, b_g,
                       w_W, b_W, bn_scale, bn_shift, *, mxu_dtype=None):
    """Returns (W_y, f_div_C) exactly like the PyTorch forward(return_nl_map=True).

    mxu_dtype: optionally cast the MXU operands (x and weights) to jnp.bfloat16
    on v6e/v7x for ~4x MXU throughput; accumulation / softmax stay in float32.
    Default None keeps full f32 fidelity with the PyTorch fp32 module.
    """
    B, C, H, W = x.shape
    Ci = w_theta.shape[0]
    N = H * W

    # Wrapper-side fusions / foldings (constant-folded at trace time):
    #  * stack theta/phi/g into one (3Ci, C) projection
    #  * fold eval-mode BatchNorm affine into the W projection
    w_qkv = jnp.concatenate([w_theta, w_phi, w_g], axis=0)               # (3Ci, C)
    b_qkv = jnp.concatenate([b_theta, b_phi, b_g], axis=0)[:, None]      # (3Ci, 1)
    w_Wf = w_W * bn_scale[:, None]                                       # (C, Ci)
    b_Wf = (b_W * bn_scale + bn_shift)[:, None]                          # (C, 1)

    # Lane-dense layout: flatten NCHW -> (B, C, H*W) in HBM (free contiguous
    # reshape); kernel blocks then have >=128-wide last dims.
    x_flat = x.reshape(B, C, N)

    if mxu_dtype is not None:
        x_flat = x_flat.astype(mxu_dtype)
        w_qkv = w_qkv.astype(mxu_dtype)
        w_Wf = w_Wf.astype(mxu_dtype)

    grid_spec = pltpu.PrefetchScalarGridSpec(
        num_scalar_prefetch=0,
        grid=(B,),                 # one image per step; B>=2 shards across v7x TCs
        in_specs=[
            pl.BlockSpec((1, C, N), lambda b: (b, 0, 0)),
            pl.BlockSpec((3 * Ci, C), lambda b: (0, 0)),
            pl.BlockSpec((3 * Ci, 1), lambda b: (0, 0)),
            pl.BlockSpec((C, Ci), lambda b: (0, 0)),
            pl.BlockSpec((C, 1), lambda b: (0, 0)),
        ],
        out_specs=[
            pl.BlockSpec((1, C, N), lambda b: (b, 0, 0)),
            pl.BlockSpec((1, Ci, W * W), lambda b: (b, 0, 0)),
        ],
    )
    out_shape = (jax.ShapeDtypeStruct((B, C, N), x.dtype),
                 jax.ShapeDtypeStruct((B, Ci, W * W), x.dtype))

    wy_flat, f_flat = pl.pallas_call(
        functools.partial(_nonlocal_kernel, H=H, W=W, Ci=Ci),
        grid_spec=grid_spec,
        out_shape=out_shape,
        compiler_params=pltpu.CompilerParams(
            dimension_semantics=("parallel",)),
    )(x_flat, w_qkv, b_qkv, w_Wf, b_Wf)

    return wy_flat.reshape(B, C, H, W), f_flat.reshape(B, Ci, W, W)


def reference(x, w_theta, b_theta, w_phi, b_phi, w_g, b_g, w_W, b_W, bn_scale, bn_shift):
    """Pure-JAX reference mirroring the PyTorch forward pass (return_nl_map=True)."""
    theta = jnp.einsum('ic,bchw->bihw', w_theta, x) + b_theta[None, :, None, None]
    phi = jnp.einsum('ic,bchw->bihw', w_phi, x) + b_phi[None, :, None, None]
    g = jnp.einsum('ic,bchw->bihw', w_g, x) + b_g[None, :, None, None]
    f = jnp.einsum('bihw,bihv->biwv', theta, phi)          # contract over H (permute variant)
    f_div = jax.nn.softmax(f, axis=-1)
    y = jnp.einsum('biwv,bihv->bihw', f_div, g)
    wy = jnp.einsum('ci,bihw->bchw', w_W, y) + b_W[None, :, None, None]
    wy = wy * bn_scale[None, :, None, None] + bn_shift[None, :, None, None]
    return wy, f_div


if __name__ == "__main__":
    B, C, H, W = 2, 4, 16, 16
    Ci = C // 2  # inter_channels = in_channels // 2

    key = jax.random.PRNGKey(0)
    ks = jax.random.split(key, 12)
    x = jax.random.normal(ks[0], (B, C, H, W), jnp.float32)

    w_theta = 0.2 * jax.random.normal(ks[1], (Ci, C), jnp.float32)
    b_theta = 0.1 * jax.random.normal(ks[2], (Ci,), jnp.float32)
    w_phi = 0.2 * jax.random.normal(ks[3], (Ci, C), jnp.float32)
    b_phi = 0.1 * jax.random.normal(ks[4], (Ci,), jnp.float32)
    w_g = 0.2 * jax.random.normal(ks[5], (Ci, C), jnp.float32)
    b_g = 0.1 * jax.random.normal(ks[6], (Ci,), jnp.float32)
    w_W = 0.2 * jax.random.normal(ks[7], (C, Ci), jnp.float32)
    b_W = 0.1 * jax.random.normal(ks[8], (C,), jnp.float32)

    # BatchNorm2d (eval mode) folded to a per-channel affine.
    # NOTE: the PyTorch __init__ zero-initializes gamma/beta (W_y would be identically 0);
    # random values are used here so the full compute path is exercised.
    gamma = 1.0 + 0.1 * jax.random.normal(ks[9], (C,), jnp.float32)
    beta = 0.1 * jax.random.normal(ks[10], (C,), jnp.float32)
    running_mean = jnp.zeros((C,), jnp.float32)
    running_var = jnp.ones((C,), jnp.float32)
    eps = 1e-5
    bn_scale = gamma / jnp.sqrt(running_var + eps)
    bn_shift = beta - running_mean * bn_scale
    # TODO(synk): training-mode BatchNorm (batch statistics + running-stat update) not implemented.

    W_y, f_div_C = non_local_block_2d(
        x, w_theta, b_theta, w_phi, b_phi, w_g, b_g, w_W, b_W, bn_scale, bn_shift)
    jax.block_until_ready((W_y, f_div_C))

    ref_Wy, ref_f = reference(
        x, w_theta, b_theta, w_phi, b_phi, w_g, b_g, w_W, b_W, bn_scale, bn_shift)

    assert W_y.shape == (B, C, H, W) and f_div_C.shape == (B, Ci, W, W)
    # Tolerance slightly relaxed vs exact-division version because the softmax
    # denominator uses the EUP approximate reciprocal (pl.reciprocal(approx=True)).
    np.testing.assert_allclose(np.asarray(W_y), np.asarray(ref_Wy), rtol=2e-3, atol=2e-3)
    np.testing.assert_allclose(np.asarray(f_div_C), np.asarray(ref_f), rtol=2e-3, atol=2e-3)

    print("KERNEL_OK")
</pallas_src>

<mosaic_0001>
module attributes {stable_mosaic.version = 11 : i64} {
  func.func @_nonlocal_kernel(%arg0: i32, %arg1: memref<1x4x256xf32, #tpu.memory_space<vmem>>, %arg2: memref<6x4xf32, #tpu.memory_space<vmem>>, %arg3: memref<6x1xf32, #tpu.memory_space<vmem>>, %arg4: memref<4x2xf32, #tpu.memory_space<vmem>>, %arg5: memref<4x1xf32, #tpu.memory_space<vmem>>, %arg6: memref<1x4x256xf32, #tpu.memory_space<vmem>>, %arg7: memref<1x2x256xf32, #tpu.memory_space<vmem>>) attributes {dimension_semantics = [#tpu.dimension_semantics<parallel>], iteration_bounds = array<i64: 2>, scalar_prefetch = 0 : i64, scratch_operands = 0 : i64, tpu.core_type = #tpu.core_type<tc>, window_params = [{transform_indices = @transform_0, window_bounds = array<i64: 1, 4, 256>}, {pipeline_mode = #tpu.pipeline_mode<synchronous>, transform_indices = @transform_1, window_bounds = array<i64: 6, 4>}, {pipeline_mode = #tpu.pipeline_mode<synchronous>, transform_indices = @transform_2, window_bounds = array<i64: 6, 1>}, {pipeline_mode = #tpu.pipeline_mode<synchronous>, transform_indices = @transform_3, window_bounds = array<i64: 4, 2>}, {pipeline_mode = #tpu.pipeline_mode<synchronous>, transform_indices = @transform_4, window_bounds = array<i64: 4, 1>}, {transform_indices = @transform_5, window_bounds = array<i64: 1, 4, 256>}, {transform_indices = @transform_6, window_bounds = array<i64: 1, 2, 256>}]} {
    %c0 = arith.constant 0 : index
    %c0_0 = arith.constant 0 : index
    %c0_1 = arith.constant 0 : index
    %0 = vector.load %arg1[%c0, %c0_0, %c0_1] : memref<1x4x256xf32, #tpu.memory_space<vmem>>, vector<1x4x256xf32>
    %1 = vector.shape_cast %0 : vector<1x4x256xf32> to vector<4x256xf32>
    %c0_2 = arith.constant 0 : index
    %c0_3 = arith.constant 0 : index
    %2 = vector.load %arg2[%c0_2, %c0_3] : memref<6x4xf32, #tpu.memory_space<vmem>>, vector<6x4xf32>
    %cst = arith.constant dense<0.000000e+00> : vector<6x256xf32>
    %3 = tpu.matmul %2, %1, %cst {dimension_numbers = #tpu.dot_dimension_numbers<[1], [0], [0], [1], [0, 0, 1, 1], [], []>} : vector<6x4xf32>, vector<4x256xf32>, vector<6x256xf32> -> vector<6x256xf32>
    %c0_4 = arith.constant 0 : index
    %c0_5 = arith.constant 0 : index
    %4 = vector.load %arg3[%c0_4, %c0_5] : memref<6x1xf32, #tpu.memory_space<vmem>>, vector<6x1xf32>
    %5 = vector.broadcast %4 : vector<6x1xf32> to vector<6x256xf32>
    %6 = arith.addf %3, %5 : vector<6x256xf32>
    %7 = vector.extract_strided_slice %6 {offsets = [0, 0], sizes = [2, 256], strides = [1, 1]} : vector<6x256xf32> to vector<2x256xf32>
    %8 = vector.shape_cast %7 : vector<2x256xf32> to vector<2x16x16xf32>
    %9 = vector.extract_strided_slice %6 {offsets = [2, 0], sizes = [2, 256], strides = [1, 1]} : vector<6x256xf32> to vector<2x256xf32>
    %10 = vector.shape_cast %9 : vector<2x256xf32> to vector<2x16x16xf32>
    %11 = vector.extract_strided_slice %6 {offsets = [4, 0], sizes = [2, 256], strides = [1, 1]} : vector<6x256xf32> to vector<2x256xf32>
    %12 = vector.shape_cast %11 : vector<2x256xf32> to vector<2x16x16xf32>
    "tpu.trace_start"() <{level = 10 : i32, message = "ihw,ihv->iwv"}> : () -> ()
    %cst_6 = arith.constant dense<0.000000e+00> : vector<2x16x16xf32>
    %13 = tpu.matmul %8, %10, %cst_6 {dimension_numbers = #tpu.dot_dimension_numbers<[1], [1], [2], [2], [0, 0, 0, 2, 1, 2], [0], [0]>} : vector<2x16x16xf32>, vector<2x16x16xf32>, vector<2x16x16xf32> -> vector<2x16x16xf32>
    "tpu.trace_stop"() : () -> ()
    %cst_7 = arith.constant dense<0xFF800000> : vector<2x16xf32>
    %14 = vector.multi_reduction <maximumf>, %13, %cst_7 [2] : vector<2x16x16xf32> to vector<2x16xf32>
    %15 = vector.shape_cast %14 : vector<2x16xf32> to vector<2x16x1xf32>
    %16 = vector.broadcast %15 : vector<2x16x1xf32> to vector<2x16x16xf32>
    %17 = arith.subf %13, %16 : vector<2x16x16xf32>
    %18 = math.exp %17 : vector<2x16x16xf32>
    %cst_8 = arith.constant dense<0.000000e+00> : vector<2x16xf32>
    %19 = vector.multi_reduction <add>, %18, %cst_8 [2] : vector<2x16x16xf32> to vector<2x16xf32>
    %20 = vector.shape_cast %19 : vector<2x16xf32> to vector<2x16x1xf32>
    %21 = tpu.reciprocal %20 {approx = true} : vector<2x16x1xf32> -> vector<2x16x1xf32>
    %22 = vector.broadcast %21 : vector<2x16x1xf32> to vector<2x16x16xf32>
    %23 = arith.mulf %18, %22 : vector<2x16x16xf32>
    %24 = vector.shape_cast %23 : vector<2x16x16xf32> to vector<2x256xf32>
    %c0_9 = arith.constant 0 : index
    %c0_10 = arith.constant 0 : index
    %c0_11 = arith.constant 0 : index
    %25 = vector.load %arg7[%c0_9, %c0_10, %c0_11] : memref<1x2x256xf32, #tpu.memory_space<vmem>>, vector<1x2x256xf32>
    %26 = vector.shape_cast %25 : vector<1x2x256xf32> to vector<2x256xf32>
    %27 = vector.shape_cast %24 : vector<2x256xf32> to vector<1x2x256xf32>
    tpu.vector_store %arg7[%c0_9, %c0_10, %c0_11], %27 {strides = array<i32>} : memref<1x2x256xf32, #tpu.memory_space<vmem>>, vector<1x2x256xf32>,
    "tpu.trace_start"() <{level = 10 : i32, message = "ihv,iwv->ihw"}> : () -> ()
    %cst_12 = arith.constant dense<0.000000e+00> : vector<2x16x16xf32>
    %28 = tpu.matmul %12, %23, %cst_12 {dimension_numbers = #tpu.dot_dimension_numbers<[2], [2], [1], [1], [0, 0, 0, 1, 1, 1], [0], [0]>} : vector<2x16x16xf32>, vector<2x16x16xf32>, vector<2x16x16xf32> -> vector<2x16x16xf32>
    "tpu.trace_stop"() : () -> ()
    %c0_13 = arith.constant 0 : index
    %c0_14 = arith.constant 0 : index
    %29 = vector.load %arg4[%c0_13, %c0_14] : memref<4x2xf32, #tpu.memory_space<vmem>>, vector<4x2xf32>
    %30 = vector.shape_cast %28 : vector<2x16x16xf32> to vector<2x256xf32>
    %cst_15 = arith.constant dense<0.000000e+00> : vector<4x256xf32>
    %31 = tpu.matmul %29, %30, %cst_15 {dimension_numbers = #tpu.dot_dimension_numbers<[1], [0], [0], [1], [0, 0, 1, 1], [], []>} : vector<4x2xf32>, vector<2x256xf32>, vector<4x256xf32> -> vector<4x256xf32>
    %c0_16 = arith.constant 0 : index
    %c0_17 = arith.constant 0 : index
    %32 = vector.load %arg5[%c0_16, %c0_17] : memref<4x1xf32, #tpu.memory_space<vmem>>, vector<4x1xf32>
    %33 = vector.broadcast %32 : vector<4x1xf32> to vector<4x256xf32>
    %34 = arith.addf %31, %33 : vector<4x256xf32>
    %c0_18 = arith.constant 0 : index
    %c0_19 = arith.constant 0 : index
    %c0_20 = arith.constant 0 : index
    %35 = vector.load %arg6[%c0_18, %c0_19, %c0_20] : memref<1x4x256xf32, #tpu.memory_space<vmem>>, vector<1x4x256xf32>
    %36 = vector.shape_cast %35 : vector<1x4x256xf32> to vector<4x256xf32>
    %37 = vector.shape_cast %34 : vector<4x256xf32> to vector<1x4x256xf32>
    tpu.vector_store %arg6[%c0_18, %c0_19, %c0_20], %37 {strides = array<i32>} : memref<1x4x256xf32, #tpu.memory_space<vmem>>, vector<1x4x256xf32>,
    return
  }
  func.func @transform_0(%arg0: i32) -> (i32, i32, i32) {
    %c0_i32 = arith.constant 0 : i32
    %c0_i32_0 = arith.constant 0 : i32
    %c0_i32_1 = arith.constant 0 : i32
    return %arg0, %c0_i32, %c0_i32_0 : i32, i32, i32
  }
  func.func @transform_1(%arg0: i32) -> (i32, i32) {
    %c0_i32 = arith.constant 0 : i32
    %c0_i32_0 = arith.constant 0 : i32
    %c0_i32_1 = arith.constant 0 : i32
    return %c0_i32, %c0_i32_0 : i32, i32
  }
  func.func @transform_2(%arg0: i32) -> (i32, i32) {
    %c0_i32 = arith.constant 0 : i32
    %c0_i32_0 = arith.constant 0 : i32
    %c0_i32_1 = arith.constant 0 : i32
    return %c0_i32, %c0_i32_0 : i32, i32
  }
  func.func @transform_3(%arg0: i32) -> (i32, i32) {
    %c0_i32 = arith.constant 0 : i32
    %c0_i32_0 = arith.constant 0 : i32
    %c0_i32_1 = arith.constant 0 : i32
    return %c0_i32, %c0_i32_0 : i32, i32
  }
  func.func @transform_4(%arg0: i32) -> (i32, i32) {
    %c0_i32 = arith.constant 0 : i32
    %c0_i32_0 = arith.constant 0 : i32
    %c0_i32_1 = arith.constant 0 : i32
    return %c0_i32, %c0_i32_0 : i32, i32
  }
  func.func @transform_5(%arg0: i32) -> (i32, i32, i32) {
    %c0_i32 = arith.constant 0 : i32
    %c0_i32_0 = arith.constant 0 : i32
    %c0_i32_1 = arith.constant 0 : i32
    return %arg0, %c0_i32, %c0_i32_0 : i32, i32, i32
  }
  func.func @transform_6(%arg0: i32) -> (i32, i32, i32) {
    %c0_i32 = arith.constant 0 : i32
    %c0_i32_0 = arith.constant 0 : i32
    %c0_i32_1 = arith.constant 0 : i32
    return %arg0, %c0_i32, %c0_i32_0 : i32, i32, i32
  }
}

</mosaic_0001>

<llo_original>
// kernel: tpu_custom_call.1
$region0: #{tpu_custom_call.1}
  #allocation0 [shape = 'u32[]', space=smem, size = 0x4, offset = 0x4, fixed_abs, tag = 'smem constant byte address 0x4 - core index']
  #allocation1 [shape = 'u32[144,128]{1,0:T(1,128)}', space=vmem, size = 0x12000, scoped, tag = 'internal scratch']
  %s0 = inlined_call_operand.vmem [shape: f32[2,4,256], index: 0, kind: input, shape index: {}]
  %s1 = inlined_call_operand.vmem [shape: f32[6,4], index: 1, kind: input, shape index: {}]
  %s2 = inlined_call_operand.vmem [shape: f32[6,1], index: 2, kind: input, shape index: {}]
  %s3 = inlined_call_operand.vmem [shape: f32[4,2], index: 3, kind: input, shape index: {}]
  %s4 = inlined_call_operand.vmem [shape: f32[4,1], index: 4, kind: input, shape index: {}]
  %s5 = inlined_call_operand.hbm [shape: f32[2,4,256], index: 5, kind: output, shape index: {0}]
  %s6 = inlined_call_operand.hbm [shape: f32[2,2,256], index: 6, kind: output, shape index: {1}]
  %7 = xla_tuple %s5, %s6
  %s8 = sld [smem:[#allocation0]]
  $region61: #{tpu_custom_call.1} parent=0
    _
  %s10 = ssub.s32 1, %s8
  %s11 = scalar_select 0, %s10, %s8
  $region1: #{tpu_custom_call.1} parent=0
    #allocation2 [shape = 'u8[8192]{0}', space=vmem, size = 0x2000, scoped, tag = 'output window, operand 0']
    #allocation3 [shape = 's32[2]{0}', space=sflag, size = 0x8, scoped, tag = 'scoped memory for tpu_custom_call.1']
    #allocation4 [shape = 'u8[4096]{0}', space=vmem, size = 0x1000, scoped, tag = 'output window, operand 1']
    #allocation5 [shape = 's32[2]{0}', space=sflag, size = 0x8, scoped, tag = 'scoped memory for tpu_custom_call.1']
    %12 = vsyncpa [#allocation3], 0
    %s13 = scalar_lea.sflag [#allocation3], 1
    %14 = vsyncpa %s13, 0
    %15 = vsyncpa [#allocation5], 0
    %s16 = scalar_lea.sflag [#allocation5], 1
    %17 = vsyncpa %s16, 0
    loop: start=0, step=1, limit=4
    $region2: #{tpu_custom_call.1} parent=1 // loop_pre_header
      _
    $region3: #{tpu_custom_call.1} parent=1 // loop_header
      %s19 = sphi 0, %s23
      %p20 = scmp.ge.s32.totalorder %s19, 4
      %s29 = sphi 0, %s31
      %s32 = sphi 0, %s29
      %s33 = sphi 0, %s32
      %s49 = sphi 0, %s33
      %s53 = sphi 0, %s53
      %s55 = sphi 0, %s53
      %s56 = sphi 0, %s55
      %s70 = sphi 0, %s56
      %s74 = sphi 0, %s74
      %s76 = sphi 0, %s74
      %s77 = sphi 0, %s76
      %s91 = sphi 0, %s77
      %s95 = sphi 0, %s95
      %s97 = sphi 0, %s95
      %s98 = sphi 0, %s97
      %s112 = sphi 0, %s98
      %s116 = sphi 0, %s116
      %s118 = sphi 0, %s116
      %s119 = sphi 0, %s118
      %s133 = sphi 0, %s119
      %s139 = sphi 0, %s141
      %s142 = sphi 0, %s139
      %s143 = sphi 0, %s142
      %s159 = sphi 0, %s143
      %s165 = sphi 0, %s167
      %s168 = sphi 0, %s165
      %s169 = sphi 0, %s168
      %s185 = sphi 0, %s169
    $region4: #{tpu_custom_call.1} parent=1 // loop_header_branch
      %22 = sbr.rel (%p20) target = $region8
    $region5: #{tpu_custom_call.1} parent=1 // loop_body
      %s24 = ssub.s32 %s19, 1
      %s25 = ssub.s32 %s19, 2
      %s26 = sadd.s32 %s19, 1
      %s27 = ssub.s32 %s19, %s26
      %p28 = scmp.eq.s32.totalorder %s27, 0
      %s30 = sadd.s32 %s29, 1
      %s31 = scalar_select %p28, %s29, %s30
      %p34 = pneg %p28
      %p35 = scmp.eq.s32.totalorder %s19, 1
      %p36 = por %p34, %p35
      %p37 = scmp.ne.s32.totalorder %s29, %s32
      %p38 = scmp.eq.s32.totalorder %s19, 0
      %p39 = por %p37, %p38
      %p40 = scmp.ne.s32.totalorder %s29, %s32
      %p41 = scmp.eq.s32.totalorder %s24, 1
      %p42 = por %p40, %p41
      %p43 = scmp.ne.s32.totalorder %s32, %s33
      %p44 = scmp.eq.s32.totalorder %s24, 0
      %p45 = por %p43, %p44
      %p46 = scmp.ne.s32.totalorder %s32, %s33
      %p47 = scmp.eq.s32.totalorder %s25, 1
      %p48 = por %p46, %p47
      %p50 = scmp.ne.s32.totalorder %s33, %s49
      %p51 = scmp.eq.s32.totalorder %s25, 0
      %p52 = por %p50, %p51
      %s54 = sadd.s32 %s53, 1
      %p57 = scmp.eq.s32.totalorder %s19, 1
      %p58 = scmp.ne.s32.totalorder %s53, %s55
      %p59 = scmp.eq.s32.totalorder %s19, 0
      %p60 = por %p58, %p59
      %p61 = scmp.ne.s32.totalorder %s53, %s55
      %p62 = scmp.eq.s32.totalorder %s24, 1
      %p63 = por %p61, %p62
      %p64 = scmp.ne.s32.totalorder %s55, %s56
      %p65 = scmp.eq.s32.totalorder %s24, 0
      %p66 = por %p64, %p65
      %p67 = scmp.ne.s32.totalorder %s55, %s56
      %p68 = scmp.eq.s32.totalorder %s25, 1
      %p69 = por %p67, %p68
      %p71 = scmp.ne.s32.totalorder %s56, %s70
      %p72 = scmp.eq.s32.totalorder %s25, 0
      %p73 = por %p71, %p72
      %s75 = sadd.s32 %s74, 1
      %p78 = scmp.eq.s32.totalorder %s19, 1
      %p79 = scmp.ne.s32.totalorder %s74, %s76
      %p80 = scmp.eq.s32.totalorder %s19, 0
      %p81 = por %p79, %p80
      %p82 = scmp.ne.s32.totalorder %s74, %s76
      %p83 = scmp.eq.s32.totalorder %s24, 1
      %p84 = por %p82, %p83
      %p85 = scmp.ne.s32.totalorder %s76, %s77
      %p86 = scmp.eq.s32.totalorder %s24, 0
      %p87 = por %p85, %p86
      %p88 = scmp.ne.s32.totalorder %s76, %s77
      %p89 = scmp.eq.s32.totalorder %s25, 1
      %p90 = por %p88, %p89
      %p92 = scmp.ne.s32.totalorder %s77, %s91
      %p93 = scmp.eq.s32.totalorder %s25, 0
      %p94 = por %p92, %p93
      %s96 = sadd.s32 %s95, 1
      %p99 = scmp.eq.s32.totalorder %s19, 1
      %p100 = scmp.ne.s32.totalorder %s95, %s97
      %p101 = scmp.eq.s32.totalorder %s19, 0
      %p102 = por %p100, %p101
      %p103 = scmp.ne.s32.totalorder %s95, %s97
      %p104 = scmp.eq.s32.totalorder %s24, 1
      %p105 = por %p103, %p104
      %p106 = scmp.ne.s32.totalorder %s97, %s98
      %p107 = scmp.eq.s32.totalorder %s24, 0
      %p108 = por %p106, %p107
      %p109 = scmp.ne.s32.totalorder %s97, %s98
      %p110 = scmp.eq.s32.totalorder %s25, 1
      %p111 = por %p109, %p110
      %p113 = scmp.ne.s32.totalorder %s98, %s112
      %p114 = scmp.eq.s32.totalorder %s25, 0
      %p115 = por %p113, %p114
      %s117 = sadd.s32 %s116, 1
      %p120 = scmp.eq.s32.totalorder %s19, 1
      %p121 = scmp.ne.s32.totalorder %s116, %s118
      %p122 = scmp.eq.s32.totalorder %s19, 0
      %p123 = por %p121, %p122
      %p124 = scmp.ne.s32.totalorder %s116, %s118
      %p125 = scmp.eq.s32.totalorder %s24, 1
      %p126 = por %p124, %p125
      %p127 = scmp.ne.s32.totalorder %s118, %s119
      %p128 = scmp.eq.s32.totalorder %s24, 0
      %p129 = por %p127, %p128
      %p130 = scmp.ne.s32.totalorder %s118, %s119
      %p131 = scmp.eq.s32.totalorder %s25, 1
      %p132 = por %p130, %p131
      %p134 = scmp.ne.s32.totalorder %s119, %s133
      %p135 = scmp.eq.s32.totalorder %s25, 0
      %p136 = por %p134, %p135
      %s137 = ssub.s32 %s19, %s26
      %p138 = scmp.eq.s32.totalorder %s137, 0
      %s140 = sadd.s32 %s139, 1
      %s141 = scalar_select %p138, %s139, %s140
      %p144 = pneg %p138
      %p145 = scmp.eq.s32.totalorder %s19, 1
      %p146 = por %p144, %p145
      %p147 = scmp.ne.s32.totalorder %s139, %s142
      %p148 = scmp.eq.s32.totalorder %s19, 0
      %p149 = por %p147, %p148
      %p150 = scmp.ne.s32.totalorder %s139, %s142
      %p151 = scmp.eq.s32.totalorder %s24, 1
      %p152 = por %p150, %p151
      %p153 = scmp.ne.s32.totalorder %s142, %s143
      %p154 = scmp.eq.s32.totalorder %s24, 0
      %p155 = por %p153, %p154
      %p156 = scmp.ne.s32.totalorder %s142, %s143
      %p157 = scmp.eq.s32.totalorder %s25, 1
      %p158 = por %p156, %p157
      %p160 = scmp.ne.s32.totalorder %s143, %s159
      %p161 = scmp.eq.s32.totalorder %s25, 0
      %p162 = por %p160, %p161
      %s163 = ssub.s32 %s19, %s26
      %p164 = scmp.eq.s32.totalorder %s163, 0
      %s166 = sadd.s32 %s165, 1
      %s167 = scalar_select %p164, %s165, %s166
      %p170 = pneg %p164
      %p171 = scmp.eq.s32.totalorder %s19, 1
      %p172 = por %p170, %p171
      %p173 = scmp.ne.s32.totalorder %s165, %s168
      %p174 = scmp.eq.s32.totalorder %s19, 0
      %p175 = por %p173, %p174
      %p176 = scmp.ne.s32.totalorder %s165, %s168
      %p177 = scmp.eq.s32.totalorder %s24, 1
      %p178 = por %p176, %p177
      %p179 = scmp.ne.s32.totalorder %s168, %s169
      %p180 = scmp.eq.s32.totalorder %s24, 0
      %p181 = por %p179, %p180
      %p182 = scmp.ne.s32.totalorder %s168, %s169
      %p183 = scmp.eq.s32.totalorder %s25, 1
      %p184 = por %p182, %p183
      %p186 = scmp.ne.s32.totalorder %s169, %s185
      %p187 = scmp.eq.s32.totalorder %s25, 0
      %p188 = por %p186, %p187
      %p189 = scmp.le.s32.totalorder 1, %s19
      %p190 = scmp.lt.s32.totalorder %s19, 3
      %p191 = pnand %p189, %p190
      %p192 = pneg %p191
      // Predicated region
      $region9: #{tpu_custom_call.1} parent=5 // pred_check
        _
      $region10: #{tpu_custom_call.1} parent=5 // pred_check_branch
        %194 = sbr.rel (%p191) target = $region12
      $region11: #{tpu_custom_call.1} parent=5 // pred_region
        %s195 = ssub.s32 %s19, 1
        // Predicated region
        $region13: #{tpu_custom_call.1} parent=11 // pred_check
          %p196 = pneg %p66
        $region14: #{tpu_custom_call.1} parent=11 // pred_check_branch
          %198 = sbr.rel (%p196) target = $region16
        $region15: #{tpu_custom_call.1} parent=11 // pred_region
          _
        $region16: #{tpu_custom_call.1} parent=11 // pred_fallthru
          _
        // Predicated region
        $region17: #{tpu_custom_call.1} parent=11 // pred_check
          %p199 = pneg %p87
        $region18: #{tpu_custom_call.1} parent=11 // pred_check_branch
          %201 = sbr.rel (%p199) target = $region20
        $region19: #{tpu_custom_call.1} parent=11 // pred_region
          _
        $region20: #{tpu_custom_call.1} parent=11 // pred_fallthru
          _
        // Predicated region
        $region21: #{tpu_custom_call.1} parent=11 // pred_check
          %p202 = pneg %p108
        $region22: #{tpu_custom_call.1} parent=11 // pred_check_branch
          %204 = sbr.rel (%p202) target = $region24
        $region23: #{tpu_custom_call.1} parent=11 // pred_region
          _
        $region24: #{tpu_custom_call.1} parent=11 // pred_fallthru
          _
        // Predicated region
        $region25: #{tpu_custom_call.1} parent=11 // pred_check
          %p205 = pneg %p129
        $region26: #{tpu_custom_call.1} parent=11 // pred_check_branch
          %207 = sbr.rel (%p205) target = $region28
        $region27: #{tpu_custom_call.1} parent=11 // pred_region
          _
        $region28: #{tpu_custom_call.1} parent=11 // pred_fallthru
          _
      $region12: #{tpu_custom_call.1} parent=5 // pred_fallthru
        _
      %p208 = scmp.lt.s32.totalorder %s19, 2
      // Predicated region
      $region29: #{tpu_custom_call.1} parent=5 // pred_check
        %p209 = pneg %p208
      $region30: #{tpu_custom_call.1} parent=5 // pred_check_branch
        %211 = sbr.rel (%p209) target = $region32
      $region31: #{tpu_custom_call.1} parent=5 // pred_region
        // Predicated region
        $region33: #{tpu_custom_call.1} parent=31 // pred_check
          %p212 = pneg %p39
        $region34: #{tpu_custom_call.1} parent=31 // pred_check_branch
          %214 = sbr.rel (%p212) target = $region36
        $region35: #{tpu_custom_call.1} parent=31 // pred_region
          %p215 = scmp.lt.s32.totalorder %s19, 1
          %s216 = scalar_select %p215, %s19, 1
          %s217 = smul.addr %s216, 2
          %s218 = smul.addr %s217, 4
          %s219 = scalar_lea.vmem %s0, %s218
        $region36: #{tpu_custom_call.1} parent=31 // pred_fallthru
          _
      $region32: #{tpu_custom_call.1} parent=5 // pred_fallthru
        _
      %p220 = scmp.le.s32.totalorder 1, %s19
      %p221 = scmp.lt.s32.totalorder %s19, 3
      %p222 = pnand %p220, %p221
      %p223 = pneg %p222
      // Predicated region
      $region37: #{tpu_custom_call.1} parent=5 // pred_check
        _
      $region38: #{tpu_custom_call.1} parent=5 // pred_check_branch
        %225 = sbr.rel (%p222) target = $region40
      $region39: #{tpu_custom_call.1} parent=5 // pred_region
        %s226 = ssub.s32 %s19, 1
        %p227 = scmp.lt.s32.totalorder %s24, 1
        %s228 = scalar_select %p227, %s24, 1
        %s229 = smul.addr %s228, 2
        %s230 = smul.addr %s229, 4
        %s231 = scalar_lea.vmem %s0, %s230
        %p232 = pneg %p45
        %p233 = pneg %p42
        %p234 = pneg %p66
        %p235 = pneg %p63
        %p236 = pneg %p87
        %p237 = pneg %p84
        %p238 = pneg %p108
        %p239 = pneg %p105
        %p240 = pneg %p129
        %p241 = pneg %p126
        %p242 = pneg %p155
        %p243 = pneg %p152
        %s244 = sand.u32 %s142, 1
        %s245 = scalar_lea.sflag [#allocation3], %s244
        %s246 = sand.u32 %s142, 1
        %s247 = smul.addr %s246, 8
        %s248 = scalar_lea.vmem [#allocation2], %s247
        %p249 = pneg %p181
        %p250 = pneg %p178
        %s251 = sand.u32 %s168, 1
        %s252 = scalar_lea.sflag [#allocation5], %s251
        %s253 = sand.u32 %s168, 1
        %s254 = smul.addr %s253, 4
        %s255 = scalar_lea.vmem [#allocation4], %s254
        %p256 = scmp.lt.s32.totalorder %s24, 1
        %s257 = scalar_select %p256, %s24, 1
        %s258 = smul.addr %s257, 2
        %s259 = smul.addr %s258, 4
        %s260 = scalar_lea.vmem %s0, %s259
        %v261 = vld [vmem:[%s260] sm:$0xff]
        %v262 = vld [vmem:[%s1] sm:$0x3f]
        %v263 = vld [vmem:[%s2] sm:$0x3f]
        %265 = vset.pattern.permute.xlu0 0
        %266 = vperm.xlu0 %265, %v263
        %v267 = vpop.permute.xlu0 %266
        %v270 = vcombine.high %v261, %v261
        %vm271 = vcmask 31744
        %v273 = vsel %vm271, %v262, 0
        %vm275 = vcmask 1043456
        %v276 = vsel %vm275, %v261, 0
        %v278 = vsel %vm275, %v270, 0
        %280 = vmatprep.subr.mxu0 %v278
        %281 = vmatpush1.msra.mxu0 %v276
        %282 = vmatprep.subr.mxu0 0.0
        %283 = vmatpush1.msra.mxu0 0.0
        %284 = vmatprep.subr.mxu0 0.0
        %285 = vmatpush1.msra.mxu0 0.0
        %286 = vmatprep.subr.mxu0 0.0
        %287 = vmatpush1.msra.mxu0 0.0
        %288 = vmatprep.subr.mxu0 0.0
        %289 = vmatpush1.msra.mxu0 0.0
        %290 = vmatprep.subr.mxu0 0.0
        %291 = vmatpush1.msra.mxu0 0.0
        %292 = vmatprep.subr.mxu0 0.0
        %293 = vmatpush1.msra.mxu0 0.0
        %294 = vmatprep.subr.mxu0 0.0
        %295 = vmatpush1.msra.mxu0 0.0
        %296 = vmatprep.subr.mxu0 0.0
        %297 = vmatpush1.msra.mxu0 0.0
        %298 = vmatprep.subr.mxu0 0.0
        %299 = vmatpush1.msra.mxu0 0.0
        %300 = vmatprep.subr.mxu0 0.0
        %301 = vmatpush1.msra.mxu0 0.0
        %302 = vmatprep.subr.mxu0 0.0
        %303 = vmatpush1.msra.mxu0 0.0
        %304 = vmatprep.subr.mxu0 0.0
        %305 = vmatpush1.msra.mxu0 0.0
        %306 = vmatprep.subr.mxu0 0.0
        %307 = vmatpush1.msra.mxu0 0.0
        %308 = vmatprep.subr.mxu0 0.0
        %309 = vmatpush1.msra.mxu0 0.0
        %310 = vmatprep.subr.mxu0 0.0
        %311 = vmatpush1.msra.mxu0 0.0
        %312 = vmatprep.subr.mxu0 0.0
        %313 = vmatpush1.msra.mxu0 0.0
        %314 = vmatprep.subr.mxu0 0.0
        %315 = vmatpush1.msra.mxu0 0.0
        %316 = vmatprep.subr.mxu0 0.0
        %317 = vmatpush1.msra.mxu0 0.0
        %318 = vmatprep.subr.mxu0 0.0
        %319 = vmatpush1.msra.mxu0 0.0
        %320 = vmatprep.subr.mxu0 0.0
        %321 = vmatpush1.msra.mxu0 0.0
        %322 = vmatprep.subr.mxu0 0.0
        %323 = vmatpush1.msra.mxu0 0.0
        %324 = vmatprep.subr.mxu0 0.0
        %325 = vmatpush1.msra.mxu0 0.0
        %326 = vmatprep.subr.mxu0 0.0
        %327 = vmatpush1.msra.mxu0 0.0
        %328 = vmatprep.subr.mxu0 0.0
        %329 = vmatpush1.msra.mxu0 0.0
        %330 = vmatprep.subr.mxu0 0.0
        %331 = vmatpush1.msra.mxu0 0.0
        %332 = vmatprep.subr.mxu0 0.0
        %333 = vmatpush1.msra.mxu0 0.0
        %334 = vmatprep.subr.mxu0 0.0
        %335 = vmatpush1.msra.mxu0 0.0
        %336 = vmatprep.subr.mxu0 0.0
        %337 = vmatpush1.msra.mxu0 0.0
        %338 = vmatprep.subr.mxu0 0.0
        %339 = vmatpush1.msra.mxu0 0.0
        %340 = vmatprep.subr.mxu0 0.0
        %341 = vmatpush1.msra.mxu0 0.0
        %342 = vmatprep.subr.mxu0 0.0
        %343 = vmatpush1.msra.mxu0 0.0
        %344 = vmatprep.mubr.f32.mxu0 0.0
        %345 = vmatmul.mubr.f32.gmra.mrb[0].mxu0 %v273
        %v346 = vpop.f32.mrb[0].mxu0
        %v347 = vadd.f32 %v267, %v346
        %v348 = vpop.f32.mrb[0].mxu0
        %v349 = vadd.f32 %v267, %v348
        %350 = vdwg.mxu0
        %352 = vrot.lane.b32.xlu0 %v347, 112
        %v353 = vpop.permute.xlu0 %352
        %355 = vrot.lane.b32.xlu0 %v347, 96
        %v356 = vpop.permute.xlu0 %355
        %358 = vrot.lane.b32.xlu0 %v347, 80
        %v359 = vpop.permute.xlu0 %358
        %361 = vrot.lane.b32.xlu0 %v347, 64
        %v362 = vpop.permute.xlu0 %361
        %364 = vrot.lane.b32.xlu0 %v347, 48
        %v365 = vpop.permute.xlu0 %364
        %367 = vrot.lane.b32.xlu0 %v347, 32
        %v368 = vpop.permute.xlu0 %367
        %370 = vrot.lane.b32.xlu0 %v347, 16
        %v371 = vpop.permute.xlu0 %370
        %374 = vrot.lane.b32.xlu0 %v349, 112
        %v375 = vpop.permute.xlu0 %374
        %377 = vrot.lane.b32.xlu0 %v349, 96
        %v378 = vpop.permute.xlu0 %377
        %380 = vrot.lane.b32.xlu0 %v349, 80
        %v381 = vpop.permute.xlu0 %380
        %383 = vrot.lane.b32.xlu0 %v349, 64
        %v384 = vpop.permute.xlu0 %383
        %386 = vrot.lane.b32.xlu0 %v349, 48
        %v387 = vpop.permute.xlu0 %386
        %389 = vrot.lane.b32.xlu0 %v349, 32
        %v390 = vpop.permute.xlu0 %389
        %392 = vrot.lane.b32.xlu0 %v349, 16
        %v393 = vpop.permute.xlu0 %392
        %v395 = vcombine.low %v347, %v356
        %v397 = vunpack.c.l.s4 1983009808
        %v398 = vunpack.c.0.s8 %v397
        %v399 = vlaneseq
        %v400 = vshrl.u32 %v399, 7
        %v401 = vsub.s32 %v398, %v400
        %v402 = vrot.slane %v395, %v401
        %v403 = vcombine.low %v353, %v359
        %v405 = vunpack.c.l.s4 1983009808
        %v406 = vunpack.c.0.s8 %v405
        %v407 = vlaneseq
        %v408 = vshrl.u32 %v407, 7
        %v409 = vsub.s32 %v406, %v408
        %v410 = vrot.slane %v403, %v409
        %v411 = vcombine.low %v362, %v368
        %v413 = vunpack.c.l.s4 1983009808
        %v414 = vunpack.c.0.s8 %v413
        %v415 = vlaneseq
        %v416 = vshrl.u32 %v415, 7
        %v417 = vsub.s32 %v414, %v416
        %v418 = vrot.slane %v411, %v417
        %v419 = vcombine.low %v365, %v371
        %v421 = vunpack.c.l.s4 1983009808
        %v422 = vunpack.c.0.s8 %v421
        %v423 = vlaneseq
        %v424 = vshrl.u32 %v423, 7
        %v425 = vsub.s32 %v422, %v424
        %v426 = vrot.slane %v419, %v425
        %v427 = vcombine.low %v402, %v410
        %v429 = vunpack.c.l.s4 1934713408
        %v430 = vunpack.c.0.s8 %v429
        %v431 = vlaneseq
        %v432 = vshrl.u32 %v431, 7
        %v433 = vsub.s32 %v430, %v432
        %v434 = vrot.slane %v427, %v433
        %v435 = vcombine.low %v418, %v426
        %v437 = vunpack.c.l.s4 1934713408
        %v438 = vunpack.c.0.s8 %v437
        %v439 = vlaneseq
        %v440 = vshrl.u32 %v439, 7
        %v441 = vsub.s32 %v438, %v440
        %v442 = vrot.slane %v435, %v441
        %v443 = vcombine.low %v434, %v442
        %v444 = vcombine.high %v434, %v442
        %v445 = vcombine.low %v349, %v378
        %v447 = vunpack.c.l.s4 1983009808
        %v448 = vunpack.c.0.s8 %v447
        %v449 = vlaneseq
        %v450 = vshrl.u32 %v449, 7
        %v451 = vsub.s32 %v448, %v450
        %v452 = vrot.slane %v445, %v451
        %v453 = vcombine.low %v375, %v381
        %v455 = vunpack.c.l.s4 1983009808
        %v456 = vunpack.c.0.s8 %v455
        %v457 = vlaneseq
        %v458 = vshrl.u32 %v457, 7
        %v459 = vsub.s32 %v456, %v458
        %v460 = vrot.slane %v453, %v459
        %v461 = vcombine.low %v384, %v390
        %v463 = vunpack.c.l.s4 1983009808
        %v464 = vunpack.c.0.s8 %v463
        %v465 = vlaneseq
        %v466 = vshrl.u32 %v465, 7
        %v467 = vsub.s32 %v464, %v466
        %v468 = vrot.slane %v461, %v467
        %v469 = vcombine.low %v387, %v393
        %v471 = vunpack.c.l.s4 1983009808
        %v472 = vunpack.c.0.s8 %v471
        %v473 = vlaneseq
        %v474 = vshrl.u32 %v473, 7
        %v475 = vsub.s32 %v472, %v474
        %v476 = vrot.slane %v469, %v475
        %v477 = vcombine.low %v452, %v460
        %v479 = vunpack.c.l.s4 1934713408
        %v480 = vunpack.c.0.s8 %v479
        %v481 = vlaneseq
        %v482 = vshrl.u32 %v481, 7
        %v483 = vsub.s32 %v480, %v482
        %v484 = vrot.slane %v477, %v483
        %v485 = vcombine.low %v468, %v476
        %v487 = vunpack.c.l.s4 1934713408
        %v488 = vunpack.c.0.s8 %v487
        %v489 = vlaneseq
        %v490 = vshrl.u32 %v489, 7
        %v491 = vsub.s32 %v488, %v490
        %v492 = vrot.slane %v485, %v491
        %v493 = vcombine.low %v484, %v492
        %v494 = vcombine.high %v484, %v492
        %v495 = vrot.slane %v347, 2
        %v496 = vrot.slane %v353, 2
        %v497 = vrot.slane %v356, 2
        %v498 = vrot.slane %v359, 2
        %v499 = vrot.slane %v362, 2
        %v500 = vrot.slane %v365, 2
        %v501 = vrot.slane %v368, 2
        %v502 = vrot.slane %v371, 2
        %v503 = vrot.slane %v349, 2
        %v504 = vrot.slane %v375, 2
        %v505 = vrot.slane %v378, 2
        %v506 = vrot.slane %v381, 2
        %v507 = vrot.slane %v384, 2
        %v508 = vrot.slane %v387, 2
        %v509 = vrot.slane %v390, 2
        %v510 = vrot.slane %v393, 2
        %v527 = vcombine.low %v495, %v497
        %v529 = vunpack.c.l.s4 1983009808
        %v530 = vunpack.c.0.s8 %v529
        %v531 = vlaneseq
        %v532 = vshrl.u32 %v531, 7
        %v533 = vsub.s32 %v530, %v532
        %v534 = vrot.slane %v527, %v533
        %v535 = vcombine.low %v496, %v498
        %v537 = vunpack.c.l.s4 1983009808
        %v538 = vunpack.c.0.s8 %v537
        %v539 = vlaneseq
        %v540 = vshrl.u32 %v539, 7
        %v541 = vsub.s32 %v538, %v540
        %v542 = vrot.slane %v535, %v541
        %v543 = vcombine.low %v499, %v501
        %v545 = vunpack.c.l.s4 1983009808
        %v546 = vunpack.c.0.s8 %v545
        %v547 = vlaneseq
        %v548 = vshrl.u32 %v547, 7
        %v549 = vsub.s32 %v546, %v548
        %v550 = vrot.slane %v543, %v549
        %v551 = vcombine.low %v500, %v502
        %v553 = vunpack.c.l.s4 1983009808
        %v554 = vunpack.c.0.s8 %v553
        %v555 = vlaneseq
        %v556 = vshrl.u32 %v555, 7
        %v557 = vsub.s32 %v554, %v556
        %v558 = vrot.slane %v551, %v557
        %v559 = vcombine.low %v534, %v542
        %v561 = vunpack.c.l.s4 1934713408
        %v562 = vunpack.c.0.s8 %v561
        %v563 = vlaneseq
        %v564 = vshrl.u32 %v563, 7
        %v565 = vsub.s32 %v562, %v564
        %v566 = vrot.slane %v559, %v565
        %v567 = vcombine.low %v550, %v558
        %v569 = vunpack.c.l.s4 1934713408
        %v570 = vunpack.c.0.s8 %v569
        %v571 = vlaneseq
        %v572 = vshrl.u32 %v571, 7
        %v573 = vsub.s32 %v570, %v572
        %v574 = vrot.slane %v567, %v573
        %v575 = vcombine.low %v566, %v574
        %v576 = vcombine.high %v566, %v574
        %v577 = vcombine.low %v503, %v505
        %v579 = vunpack.c.l.s4 1983009808
        %v580 = vunpack.c.0.s8 %v579
        %v581 = vlaneseq
        %v582 = vshrl.u32 %v581, 7
        %v583 = vsub.s32 %v580, %v582
        %v584 = vrot.slane %v577, %v583
        %v585 = vcombine.low %v504, %v506
        %v587 = vunpack.c.l.s4 1983009808
        %v588 = vunpack.c.0.s8 %v587
        %v589 = vlaneseq
        %v590 = vshrl.u32 %v589, 7
        %v591 = vsub.s32 %v588, %v590
        %v592 = vrot.slane %v585, %v591
        %v593 = vcombine.low %v507, %v509
        %v595 = vunpack.c.l.s4 1983009808
        %v596 = vunpack.c.0.s8 %v595
        %v597 = vlaneseq
        %v598 = vshrl.u32 %v597, 7
        %v599 = vsub.s32 %v596, %v598
        %v600 = vrot.slane %v593, %v599
        %v601 = vcombine.low %v508, %v510
        %v603 = vunpack.c.l.s4 1983009808
        %v604 = vunpack.c.0.s8 %v603
        %v605 = vlaneseq
        %v606 = vshrl.u32 %v605, 7
        %v607 = vsub.s32 %v604, %v606
        %v608 = vrot.slane %v601, %v607
        %v609 = vcombine.low %v584, %v592
        %v611 = vunpack.c.l.s4 1934713408
        %v612 = vunpack.c.0.s8 %v611
        %v613 = vlaneseq
        %v614 = vshrl.u32 %v613, 7
        %v615 = vsub.s32 %v612, %v614
        %v616 = vrot.slane %v609, %v615
        %v617 = vcombine.low %v600, %v608
        %v619 = vunpack.c.l.s4 1934713408
        %v620 = vunpack.c.0.s8 %v619
        %v621 = vlaneseq
        %v622 = vshrl.u32 %v621, 7
        %v623 = vsub.s32 %v620, %v622
        %v624 = vrot.slane %v617, %v623
        %v625 = vcombine.low %v616, %v624
        %v626 = vcombine.high %v616, %v624
        %v627 = vrot.slane %v347, 4
        %v628 = vrot.slane %v353, 4
        %v629 = vrot.slane %v356, 4
        %v630 = vrot.slane %v359, 4
        %v631 = vrot.slane %v362, 4
        %v632 = vrot.slane %v365, 4
        %v633 = vrot.slane %v368, 4
        %v634 = vrot.slane %v371, 4
        %v635 = vrot.slane %v349, 4
        %v636 = vrot.slane %v375, 4
        %v637 = vrot.slane %v378, 4
        %v638 = vrot.slane %v381, 4
        %v639 = vrot.slane %v384, 4
        %v640 = vrot.slane %v387, 4
        %v641 = vrot.slane %v390, 4
        %v642 = vrot.slane %v393, 4
        %v659 = vcombine.low %v627, %v629
        %v661 = vunpack.c.l.s4 1983009808
        %v662 = vunpack.c.0.s8 %v661
        %v663 = vlaneseq
        %v664 = vshrl.u32 %v663, 7
        %v665 = vsub.s32 %v662, %v664
        %v666 = vrot.slane %v659, %v665
        %v667 = vcombine.low %v628, %v630
        %v669 = vunpack.c.l.s4 1983009808
        %v670 = vunpack.c.0.s8 %v669
        %v671 = vlaneseq
        %v672 = vshrl.u32 %v671, 7
        %v673 = vsub.s32 %v670, %v672
        %v674 = vrot.slane %v667, %v673
        %v675 = vcombine.low %v631, %v633
        %v677 = vunpack.c.l.s4 1983009808
        %v678 = vunpack.c.0.s8 %v677
        %v679 = vlaneseq
        %v680 = vshrl.u32 %v679, 7
        %v681 = vsub.s32 %v678, %v680
        %v682 = vrot.slane %v675, %v681
        %v683 = vcombine.low %v632, %v634
        %v685 = vunpack.c.l.s4 1983009808
        %v686 = vunpack.c.0.s8 %v685
        %v687 = vlaneseq
        %v688 = vshrl.u32 %v687, 7
        %v689 = vsub.s32 %v686, %v688
        %v690 = vrot.slane %v683, %v689
        %v691 = vcombine.low %v666, %v674
        %v693 = vunpack.c.l.s4 1934713408
        %v694 = vunpack.c.0.s8 %v693
        %v695 = vlaneseq
        %v696 = vshrl.u32 %v695, 7
        %v697 = vsub.s32 %v694, %v696
        %v698 = vrot.slane %v691, %v697
        %v699 = vcombine.low %v682, %v690
        %v701 = vunpack.c.l.s4 1934713408
        %v702 = vunpack.c.0.s8 %v701
        %v703 = vlaneseq
        %v704 = vshrl.u32 %v703, 7
        %v705 = vsub.s32 %v702, %v704
        %v706 = vrot.slane %v699, %v705
        %v707 = vcombine.low %v698, %v706
        %v708 = vcombine.high %v698, %v706
        %v709 = vcombine.low %v635, %v637
        %v711 = vunpack.c.l.s4 1983009808
        %v712 = vunpack.c.0.s8 %v711
        %v713 = vlaneseq
        %v714 = vshrl.u32 %v713, 7
        %v715 = vsub.s32 %v712, %v714
        %v716 = vrot.slane %v709, %v715
        %v717 = vcombine.low %v636, %v638
        %v719 = vunpack.c.l.s4 1983009808
        %v720 = vunpack.c.0.s8 %v719
        %v721 = vlaneseq
        %v722 = vshrl.u32 %v721, 7
        %v723 = vsub.s32 %v720, %v722
        %v724 = vrot.slane %v717, %v723
        %v725 = vcombine.low %v639, %v641
        %v727 = vunpack.c.l.s4 1983009808
        %v728 = vunpack.c.0.s8 %v727
        %v729 = vlaneseq
        %v730 = vshrl.u32 %v729, 7
        %v731 = vsub.s32 %v728, %v730
        %v732 = vrot.slane %v725, %v731
        %v733 = vcombine.low %v640, %v642
        %v735 = vunpack.c.l.s4 1983009808
        %v736 = vunpack.c.0.s8 %v735
        %v737 = vlaneseq
        %v738 = vshrl.u32 %v737, 7
        %v739 = vsub.s32 %v736, %v738
        %v740 = vrot.slane %v733, %v739
        %v741 = vcombine.low %v716, %v724
        %v743 = vunpack.c.l.s4 1934713408
        %v744 = vunpack.c.0.s8 %v743
        %v745 = vlaneseq
        %v746 = vshrl.u32 %v745, 7
        %v747 = vsub.s32 %v744, %v746
        %v748 = vrot.slane %v741, %v747
        %v749 = vcombine.low %v732, %v740
        %v751 = vunpack.c.l.s4 1934713408
        %v752 = vunpack.c.0.s8 %v751
        %v753 = vlaneseq
        %v754 = vshrl.u32 %v753, 7
        %v755 = vsub.s32 %v752, %v754
        %v756 = vrot.slane %v749, %v755
        %v757 = vcombine.low %v748, %v756
        %v758 = vcombine.high %v748, %v756
        %759 = vxpose.xlu0.b32.start [1/16] %v443, 128
        %760 = vxpose.xlu0.b32.cont [2/16] %v493, 128
        %761 = vxpose.xlu0.b32.cont [3/16] 0.0, 128
        %762 = vxpose.xlu0.b32.cont [4/16] 0.0, 128
        %763 = vxpose.xlu0.b32.cont [5/16] 0.0, 128
        %764 = vxpose.xlu0.b32.cont [6/16] 0.0, 128
        %765 = vxpose.xlu0.b32.cont [7/16] 0.0, 128
        %766 = vxpose.xlu0.b32.cont [8/16] 0.0, 128
        %767 = vxpose.xlu0.b32.cont [9/16] 0.0, 128
        %768 = vxpose.xlu0.b32.cont [10/16] 0.0, 128
        %769 = vxpose.xlu0.b32.cont [11/16] 0.0, 128
        %770 = vxpose.xlu0.b32.cont [12/16] 0.0, 128
        %771 = vxpose.xlu0.b32.cont [13/16] 0.0, 128
        %772 = vxpose.xlu0.b32.cont [14/16] 0.0, 128
        %773 = vxpose.xlu0.b32.cont [15/16] 0.0, 128
        %774 = vxpose.xlu0.b32.end [16/16] 0.0, 128
        %v775 = vpop.trf.xlu0
        %v776 = vpop.trf.xlu0
        %v777 = vpop.trf.xlu0
        %v778 = vpop.trf.xlu0
        %v779 = vpop.trf.xlu0
        %v780 = vpop.trf.xlu0
        %v781 = vpop.trf.xlu0
        %v782 = vpop.trf.xlu0
        %v783 = vpop.trf.xlu0
        %v784 = vpop.trf.xlu0
        %v785 = vpop.trf.xlu0
        %v786 = vpop.trf.xlu0
        %v787 = vpop.trf.xlu0
        %v788 = vpop.trf.xlu0
        %v789 = vpop.trf.xlu0
        %v790 = vpop.trf.xlu0
        %vm791 = vcmask 130048
        %v793 = vsel %vm791, %v775, 0
        %v796 = vsel %vm791, %v776, 0
        %798 = vmatprep.subr.mxu0 0.0
        %799 = vmatpush1.msra.mxu0 %v575
        %800 = vmatprep.subr.mxu0 0.0
        %801 = vmatpush1.msra.mxu0 %v625
        %802 = vmatprep.subr.mxu0 0.0
        %803 = vmatpush1.msra.mxu0 0.0
        %804 = vmatprep.subr.mxu0 0.0
        %805 = vmatpush1.msra.mxu0 0.0
        %806 = vmatprep.subr.mxu0 0.0
        %807 = vmatpush1.msra.mxu0 0.0
        %808 = vmatprep.subr.mxu0 0.0
        %809 = vmatpush1.msra.mxu0 0.0
        %810 = vmatprep.subr.mxu0 0.0
        %811 = vmatpush1.msra.mxu0 0.0
        %812 = vmatprep.subr.mxu0 0.0
        %813 = vmatpush1.msra.mxu0 0.0
        %814 = vmatprep.subr.mxu0 0.0
        %815 = vmatpush1.msra.mxu0 0.0
        %816 = vmatprep.subr.mxu0 0.0
        %817 = vmatpush1.msra.mxu0 0.0
        %818 = vmatprep.subr.mxu0 0.0
        %819 = vmatpush1.msra.mxu0 0.0
        %820 = vmatprep.subr.mxu0 0.0
        %821 = vmatpush1.msra.mxu0 0.0
        %822 = vmatprep.subr.mxu0 0.0
        %823 = vmatpush1.msra.mxu0 0.0
        %824 = vmatprep.subr.mxu0 0.0
        %825 = vmatpush1.msra.mxu0 0.0
        %826 = vmatprep.subr.mxu0 0.0
        %827 = vmatpush1.msra.mxu0 0.0
        %828 = vmatprep.subr.mxu0 0.0
        %829 = vmatpush1.msra.mxu0 0.0
        %830 = vmatprep.subr.mxu0 0.0
        %831 = vmatpush1.msra.mxu0 0.0
        %832 = vmatprep.subr.mxu0 0.0
        %833 = vmatpush1.msra.mxu0 0.0
        %834 = vmatprep.subr.mxu0 0.0
        %835 = vmatpush1.msra.mxu0 0.0
        %836 = vmatprep.subr.mxu0 0.0
        %837 = vmatpush1.msra.mxu0 0.0
        %838 = vmatprep.subr.mxu0 0.0
        %839 = vmatpush1.msra.mxu0 0.0
        %840 = vmatprep.subr.mxu0 0.0
        %841 = vmatpush1.msra.mxu0 0.0
        %842 = vmatprep.subr.mxu0 0.0
        %843 = vmatpush1.msra.mxu0 0.0
        %844 = vmatprep.subr.mxu0 0.0
        %845 = vmatpush1.msra.mxu0 0.0
        %846 = vmatprep.subr.mxu0 0.0
        %847 = vmatpush1.msra.mxu0 0.0
        %848 = vmatprep.subr.mxu0 0.0
        %849 = vmatpush1.msra.mxu0 0.0
        %850 = vmatprep.subr.mxu0 0.0
        %851 = vmatpush1.msra.mxu0 0.0
        %852 = vmatprep.subr.mxu0 0.0
        %853 = vmatpush1.msra.mxu0 0.0
        %854 = vmatprep.subr.mxu0 0.0
        %855 = vmatpush1.msra.mxu0 0.0
        %856 = vmatprep.subr.mxu0 0.0
        %857 = vmatpush1.msra.mxu0 0.0
        %858 = vmatprep.subr.mxu0 0.0
        %859 = vmatpush1.msra.mxu0 0.0
        %860 = vmatprep.subr.mxu0 0.0
        %861 = vmatpush1.msra.mxu0 0.0
        %862 = vmatprep.mubr.f32.mxu0 0.0
        %863 = vmatmul.mubr.f32.gmra.mrb[0].mxu0 %v793
        %v864 = vpop.f32.mrb[0].mxu0
        %v865 = vadd.f32 0.0, %v864
        %v866 = vpop.f32.mrb[0].mxu0
        %867 = vmatprep.mubr.f32.mxu0 0.0
        %868 = vmatmul.mubr.f32.gmra.mrb[0].mxu0 %v796
        %v869 = vpop.f32.mrb[0].mxu0
        %v870 = vadd.f32 0.0, %v869
        %v871 = vpop.f32.mrb[0].mxu0
        %872 = vdwg.mxu0
        %873 = vxpose.xlu0.b32.start [1/16] %v444, 128
        %874 = vxpose.xlu0.b32.cont [2/16] %v494, 128
        %875 = vxpose.xlu0.b32.cont [3/16] 0.0, 128
        %876 = vxpose.xlu0.b32.cont [4/16] 0.0, 128
        %877 = vxpose.xlu0.b32.cont [5/16] 0.0, 128
        %878 = vxpose.xlu0.b32.cont [6/16] 0.0, 128
        %879 = vxpose.xlu0.b32.cont [7/16] 0.0, 128
        %880 = vxpose.xlu0.b32.cont [8/16] 0.0, 128
        %881 = vxpose.xlu0.b32.cont [9/16] 0.0, 128
        %882 = vxpose.xlu0.b32.cont [10/16] 0.0, 128
        %883 = vxpose.xlu0.b32.cont [11/16] 0.0, 128
        %884 = vxpose.xlu0.b32.cont [12/16] 0.0, 128
        %885 = vxpose.xlu0.b32.cont [13/16] 0.0, 128
        %886 = vxpose.xlu0.b32.cont [14/16] 0.0, 128
        %887 = vxpose.xlu0.b32.cont [15/16] 0.0, 128
        %888 = vxpose.xlu0.b32.end [16/16] 0.0, 128
        %v889 = vpop.trf.xlu0
        %v890 = vpop.trf.xlu0
        %v891 = vpop.trf.xlu0
        %v892 = vpop.trf.xlu0
        %v893 = vpop.trf.xlu0
        %v894 = vpop.trf.xlu0
        %v895 = vpop.trf.xlu0
        %v896 = vpop.trf.xlu0
        %v897 = vpop.trf.xlu0
        %v898 = vpop.trf.xlu0
        %v899 = vpop.trf.xlu0
        %v900 = vpop.trf.xlu0
        %v901 = vpop.trf.xlu0
        %v902 = vpop.trf.xlu0
        %v903 = vpop.trf.xlu0
        %v904 = vpop.trf.xlu0
        %v906 = vsel %vm791, %v889, 0
        %v909 = vsel %vm791, %v890, 0
        %911 = vmatprep.subr.mxu0 0.0
        %912 = vmatpush1.msra.mxu0 %v576
        %913 = vmatprep.subr.mxu0 0.0
        %914 = vmatpush1.msra.mxu0 %v626
        %915 = vmatprep.subr.mxu0 0.0
        %916 = vmatpush1.msra.mxu0 0.0
        %917 = vmatprep.subr.mxu0 0.0
        %918 = vmatpush1.msra.mxu0 0.0
        %919 = vmatprep.subr.mxu0 0.0
        %920 = vmatpush1.msra.mxu0 0.0
        %921 = vmatprep.subr.mxu0 0.0
        %922 = vmatpush1.msra.mxu0 0.0
        %923 = vmatprep.subr.mxu0 0.0
        %924 = vmatpush1.msra.mxu0 0.0
        %925 = vmatprep.subr.mxu0 0.0
        %926 = vmatpush1.msra.mxu0 0.0
        %927 = vmatprep.subr.mxu0 0.0
        %928 = vmatpush1.msra.mxu0 0.0
        %929 = vmatprep.subr.mxu0 0.0
        %930 = vmatpush1.msra.mxu0 0.0
        %931 = vmatprep.subr.mxu0 0.0
        %932 = vmatpush1.msra.mxu0 0.0
        %933 = vmatprep.subr.mxu0 0.0
        %934 = vmatpush1.msra.mxu0 0.0
        %935 = vmatprep.subr.mxu0 0.0
        %936 = vmatpush1.msra.mxu0 0.0
        %937 = vmatprep.subr.mxu0 0.0
        %938 = vmatpush1.msra.mxu0 0.0
        %939 = vmatprep.subr.mxu0 0.0
        %940 = vmatpush1.msra.mxu0 0.0
        %941 = vmatprep.subr.mxu0 0.0
        %942 = vmatpush1.msra.mxu0 0.0
        %943 = vmatprep.subr.mxu0 0.0
        %944 = vmatpush1.msra.mxu0 0.0
        %945 = vmatprep.subr.mxu0 0.0
        %946 = vmatpush1.msra.mxu0 0.0
        %947 = vmatprep.subr.mxu0 0.0
        %948 = vmatpush1.msra.mxu0 0.0
        %949 = vmatprep.subr.mxu0 0.0
        %950 = vmatpush1.msra.mxu0 0.0
        %951 = vmatprep.subr.mxu0 0.0
        %952 = vmatpush1.msra.mxu0 0.0
        %953 = vmatprep.subr.mxu0 0.0
        %954 = vmatpush1.msra.mxu0 0.0
        %955 = vmatprep.subr.mxu0 0.0
        %956 = vmatpush1.msra.mxu0 0.0
        %957 = vmatprep.subr.mxu0 0.0
        %958 = vmatpush1.msra.mxu0 0.0
        %959 = vmatprep.subr.mxu0 0.0
        %960 = vmatpush1.msra.mxu0 0.0
        %961 = vmatprep.subr.mxu0 0.0
        %962 = vmatpush1.msra.mxu0 0.0
        %963 = vmatprep.subr.mxu0 0.0
        %964 = vmatpush1.msra.mxu0 0.0
        %965 = vmatprep.subr.mxu0 0.0
        %966 = vmatpush1.msra.mxu0 0.0
        %967 = vmatprep.subr.mxu0 0.0
        %968 = vmatpush1.msra.mxu0 0.0
        %969 = vmatprep.subr.mxu0 0.0
        %970 = vmatpush1.msra.mxu0 0.0
        %971 = vmatprep.subr.mxu0 0.0
        %972 = vmatpush1.msra.mxu0 0.0
        %973 = vmatprep.subr.mxu0 0.0
        %974 = vmatpush1.msra.mxu0 0.0
        %975 = vmatprep.mubr.f32.mxu0 0.0
        %976 = vmatmul.mubr.f32.gmra.mrb[0].mxu0 %v906
        %v977 = vpop.f32.mrb[0].mxu0
        %v978 = vadd.f32 0.0, %v977
        %v979 = vpop.f32.mrb[0].mxu0
        %980 = vmatprep.mubr.f32.mxu0 0.0
        %981 = vmatmul.mubr.f32.gmra.mrb[0].mxu0 %v909
        %v982 = vpop.f32.mrb[0].mxu0
        %v983 = vadd.f32 0.0, %v982
        %v984 = vpop.f32.mrb[0].mxu0
        %985 = vdwg.mxu0
        %v986 = vsel %vm791, %v865, -inf
        %987 = vmax.xlane.f32.xlu0 %v986
        %v988 = vpop.xlane.xlu0 %987
        %v989 = vsel %vm791, %v870, -inf
        %990 = vmax.xlane.f32.xlu0 %v989
        %v991 = vpop.xlane.xlu0 %990
        %v992 = vsel %vm791, %v978, -inf
        %993 = vmax.xlane.f32.xlu0 %v992
        %v994 = vpop.xlane.xlu0 %993
        %v995 = vsel %vm791, %v983, -inf
        %996 = vmax.xlane.f32.xlu0 %v995
        %v997 = vpop.xlane.xlu0 %996
        %v998 = vsub.f32 %v865, %v988
        %v999 = vsub.f32 %v870, %v991
        %v1000 = vsub.f32 %v978, %v994
        %v1001 = vsub.f32 %v983, %v997
        %v1002 = vmul.f32 %v998, 1.442695
        %v1003 = vpow.pop %v1002
        %v1004 = vmul.f32 %v999, 1.442695
        %v1005 = vpow.pop %v1004
        %v1006 = vmul.f32 %v1000, 1.442695
        %v1007 = vpow.pop %v1006
        %v1008 = vmul.f32 %v1001, 1.442695
        %v1009 = vpow.pop %v1008
        %v1010 = vsel %vm791, %v1003, 0.0
        %1011 = vadd.xlane.f32.xlu0 %v1010
        %v1012 = vpop.xlane.xlu0 %1011
        %v1013 = vsel %vm791, %v1005, 0.0
        %1014 = vadd.xlane.f32.xlu0 %v1013
        %v1015 = vpop.xlane.xlu0 %1014
        %v1016 = vsel %vm791, %v1007, 0.0
        %1017 = vadd.xlane.f32.xlu0 %v1016
        %v1018 = vpop.xlane.xlu0 %1017
        %v1019 = vsel %vm791, %v1009, 0.0
        %1020 = vadd.xlane.f32.xlu0 %v1019
        %v1021 = vpop.xlane.xlu0 %1020
        %v1022 = vrcp.pop %v1012
        %v1023 = vrcp.pop %v1015
        %v1024 = vrcp.pop %v1018
        %v1025 = vrcp.pop %v1021
        %v1026 = vmul.f32 %v1003, %v1022
        %v1027 = vmul.f32 %v1005, %v1023
        %v1028 = vmul.f32 %v1007, %v1024
        %v1029 = vmul.f32 %v1009, %v1025
        %v1030 = vcombine.high %v1026, 0.0
        %v1032 = vunpack.c.l.s4 1983009808
        %v1033 = vunpack.c.0.s8 %v1032
        %v1034 = vlaneseq
        %v1035 = vshrl.u32 %v1034, 7
        %v1036 = vsub.s32 %v1033, %v1035
        %v1037 = vrot.slane %v1026, %v1036
        %v1039 = vunpack.c.l.s4 1983009808
        %v1040 = vunpack.c.0.s8 %v1039
        %v1041 = vlaneseq
        %v1042 = vshrl.u32 %v1041, 7
        %v1043 = vsub.s32 %v1040, %v1042
        %v1044 = vrot.slane %v1030, %v1043
        %v1045 = vcombine.high %v1028, 0.0
        %v1047 = vunpack.c.l.s4 1983009808
        %v1048 = vunpack.c.0.s8 %v1047
        %v1049 = vlaneseq
        %v1050 = vshrl.u32 %v1049, 7
        %v1051 = vsub.s32 %v1048, %v1050
        %v1052 = vrot.slane %v1028, %v1051
        %v1054 = vunpack.c.l.s4 1983009808
        %v1055 = vunpack.c.0.s8 %v1054
        %v1056 = vlaneseq
        %v1057 = vshrl.u32 %v1056, 7
        %v1058 = vsub.s32 %v1055, %v1057
        %v1059 = vrot.slane %v1045, %v1058
        %v1060 = vcombine.low %v1037, %v1052
        %v1061 = vcombine.high %v1037, %v1052
        %v1063 = vunpack.c.l.s4 1934713408
        %v1064 = vunpack.c.0.s8 %v1063
        %v1065 = vlaneseq
        %v1066 = vshrl.u32 %v1065, 7
        %v1067 = vsub.s32 %v1064, %v1066
        %v1068 = vrot.slane %v1060, %v1067
        %v1070 = vunpack.c.l.s4 1934713408
        %v1071 = vunpack.c.0.s8 %v1070
        %v1072 = vlaneseq
        %v1073 = vshrl.u32 %v1072, 7
        %v1074 = vsub.s32 %v1071, %v1073
        %v1075 = vrot.slane %v1061, %v1074
        %v1076 = vcombine.low %v1044, %v1059
        %v1077 = vcombine.high %v1044, %v1059
        %v1079 = vunpack.c.l.s4 1934713408
        %v1080 = vunpack.c.0.s8 %v1079
        %v1081 = vlaneseq
        %v1082 = vshrl.u32 %v1081, 7
        %v1083 = vsub.s32 %v1080, %v1082
        %v1084 = vrot.slane %v1076, %v1083
        %v1086 = vunpack.c.l.s4 1934713408
        %v1087 = vunpack.c.0.s8 %v1086
        %v1088 = vlaneseq
        %v1089 = vshrl.u32 %v1088, 7
        %v1090 = vsub.s32 %v1087, %v1089
        %v1091 = vrot.slane %v1077, %v1090
        %v1092 = vcombine.high %v1068, 0.0
        %v1093 = vcombine.high %v1075, 0.0
        %v1094 = vcombine.high %v1084, 0.0
        %v1095 = vcombine.high %v1091, 0.0
        %v1096 = vcombine.high %v1027, 0.0
        %v1098 = vunpack.c.l.s4 1983009808
        %v1099 = vunpack.c.0.s8 %v1098
        %v1100 = vlaneseq
        %v1101 = vshrl.u32 %v1100, 7
        %v1102 = vsub.s32 %v1099, %v1101
        %v1103 = vrot.slane %v1027, %v1102
        %v1105 = vunpack.c.l.s4 1983009808
        %v1106 = vunpack.c.0.s8 %v1105
        %v1107 = vlaneseq
        %v1108 = vshrl.u32 %v1107, 7
        %v1109 = vsub.s32 %v1106, %v1108
        %v1110 = vrot.slane %v1096, %v1109
        %v1111 = vcombine.high %v1029, 0.0
        %v1113 = vunpack.c.l.s4 1983009808
        %v1114 = vunpack.c.0.s8 %v1113
        %v1115 = vlaneseq
        %v1116 = vshrl.u32 %v1115, 7
        %v1117 = vsub.s32 %v1114, %v1116
        %v1118 = vrot.slane %v1029, %v1117
        %v1120 = vunpack.c.l.s4 1983009808
        %v1121 = vunpack.c.0.s8 %v1120
        %v1122 = vlaneseq
        %v1123 = vshrl.u32 %v1122, 7
        %v1124 = vsub.s32 %v1121, %v1123
        %v1125 = vrot.slane %v1111, %v1124
        %v1126 = vcombine.low %v1103, %v1118
        %v1127 = vcombine.high %v1103, %v1118
        %v1129 = vunpack.c.l.s4 1934713408
        %v1130 = vunpack.c.0.s8 %v1129
        %v1131 = vlaneseq
        %v1132 = vshrl.u32 %v1131, 7
        %v1133 = vsub.s32 %v1130, %v1132
        %v1134 = vrot.slane %v1126, %v1133
        %v1136 = vunpack.c.l.s4 1934713408
        %v1137 = vunpack.c.0.s8 %v1136
        %v1138 = vlaneseq
        %v1139 = vshrl.u32 %v1138, 7
        %v1140 = vsub.s32 %v1137, %v1139
        %v1141 = vrot.slane %v1127, %v1140
        %v1142 = vcombine.low %v1110, %v1125
        %v1143 = vcombine.high %v1110, %v1125
        %v1145 = vunpack.c.l.s4 1934713408
        %v1146 = vunpack.c.0.s8 %v1145
        %v1147 = vlaneseq
        %v1148 = vshrl.u32 %v1147, 7
        %v1149 = vsub.s32 %v1146, %v1148
        %v1150 = vrot.slane %v1142, %v1149
        %v1152 = vunpack.c.l.s4 1934713408
        %v1153 = vunpack.c.0.s8 %v1152
        %v1154 = vlaneseq
        %v1155 = vshrl.u32 %v1154, 7
        %v1156 = vsub.s32 %v1153, %v1155
        %v1157 = vrot.slane %v1143, %v1156
        %v1158 = vcombine.high %v1134, 0.0
        %v1159 = vcombine.high %v1141, 0.0
        %v1160 = vcombine.high %v1150, 0.0
        %v1161 = vcombine.high %v1157, 0.0
        %1163 = vrot.lane.b32.xlu0 %v1092, 16
        %v1164 = vpop.permute.xlu0 %1163
        %1167 = vrot.lane.b32.xlu0 %v1075, 32
        %v1168 = vpop.permute.xlu0 %1167
        %1171 = vrot.lane.b32.xlu0 %v1093, 48
        %v1172 = vpop.permute.xlu0 %1171
        %1175 = vrot.lane.b32.xlu0 %v1084, 64
        %v1176 = vpop.permute.xlu0 %1175
        %1179 = vrot.lane.b32.xlu0 %v1094, 80
        %v1180 = vpop.permute.xlu0 %1179
        %1183 = vrot.lane.b32.xlu0 %v1091, 96
        %v1184 = vpop.permute.xlu0 %1183
        %1187 = vrot.lane.b32.xlu0 %v1095, 112
        %v1188 = vpop.permute.xlu0 %1187
        %1191 = vrot.lane.b32.xlu0 %v1158, 16
        %v1192 = vpop.permute.xlu0 %1191
        %1195 = vrot.lane.b32.xlu0 %v1141, 32
        %v1196 = vpop.permute.xlu0 %1195
        %1199 = vrot.lane.b32.xlu0 %v1159, 48
        %v1200 = vpop.permute.xlu0 %1199
        %1203 = vrot.lane.b32.xlu0 %v1150, 64
        %v1204 = vpop.permute.xlu0 %1203
        %1207 = vrot.lane.b32.xlu0 %v1160, 80
        %v1208 = vpop.permute.xlu0 %1207
        %1211 = vrot.lane.b32.xlu0 %v1157, 96
        %v1212 = vpop.permute.xlu0 %1211
        %1215 = vrot.lane.b32.xlu0 %v1161, 112
        %v1216 = vpop.permute.xlu0 %1215
        %v1218 = vsel %vm791, %v1068, %v1164
        %vm1219 = vcmask 261120
        %v1220 = vsel %vm1219, %v1218, %v1168
        %vm1221 = vcmask 392192
        %v1222 = vsel %vm1221, %v1220, %v1172
        %vm1223 = vcmask 523264
        %v1224 = vsel %vm1223, %v1222, %v1176
        %vm1225 = vcmask 654336
        %v1226 = vsel %vm1225, %v1224, %v1180
        %vm1227 = vcmask 785408
        %v1228 = vsel %vm1227, %v1226, %v1184
        %vm1229 = vcmask 916480
        %v1230 = vsel %vm1229, %v1228, %v1188
        %v1231 = vsel %vm791, %v1134, %v1192
        %v1232 = vsel %vm1219, %v1231, %v1196
        %v1233 = vsel %vm1221, %v1232, %v1200
        %v1234 = vsel %vm1223, %v1233, %v1204
        %v1235 = vsel %vm1225, %v1234, %v1208
        %v1236 = vsel %vm1227, %v1235, %v1212
        %v1237 = vsel %vm1229, %v1236, %v1216
        %v1240 = vcombine.low %v1230, %v1237
        %v1242 = vunpack.c.l.s4 1983009808
        %v1243 = vunpack.c.0.s8 %v1242
        %v1244 = vlaneseq
        %v1245 = vshrl.u32 %v1244, 7
        %v1246 = vsub.s32 %v1243, %v1245
        %v1247 = vrot.slane %v1240, %v1246
        %1249 = vst [vmem:[%s255] sm:$0xf] %v1247
        %v1251 = vsel %vm791, %v707, 0
        %v1254 = vsel %vm791, %v757, 0
        %v1257 = vsel %vm791, %v1026, 0
        %v1260 = vsel %vm791, %v1027, 0
        %1262 = vmatprep.subr.mxu0 0.0
        %1263 = vmatpush1.xpose.msra.mxu0 %v1257
        %1264 = vmatprep.subr.mxu0 0.0
        %1265 = vmatpush1.xpose.msra.mxu0 %v1260
        %1266 = vmatprep.subr.mxu0 0.0
        %1267 = vmatpush1.xpose.msra.mxu0 0.0
        %1268 = vmatprep.subr.mxu0 0.0
        %1269 = vmatpush1.xpose.msra.mxu0 0.0
        %1270 = vmatprep.subr.mxu0 0.0
        %1271 = vmatpush1.xpose.msra.mxu0 0.0
        %1272 = vmatprep.subr.mxu0 0.0
        %1273 = vmatpush1.xpose.msra.mxu0 0.0
        %1274 = vmatprep.subr.mxu0 0.0
        %1275 = vmatpush1.xpose.msra.mxu0 0.0
        %1276 = vmatprep.subr.mxu0 0.0
        %1277 = vmatpush1.xpose.msra.mxu0 0.0
        %1278 = vmatprep.subr.mxu0 0.0
        %1279 = vmatpush1.xpose.msra.mxu0 0.0
        %1280 = vmatprep.subr.mxu0 0.0
        %1281 = vmatpush1.xpose.msra.mxu0 0.0
        %1282 = vmatprep.subr.mxu0 0.0
        %1283 = vmatpush1.xpose.msra.mxu0 0.0
        %1284 = vmatprep.subr.mxu0 0.0
        %1285 = vmatpush1.xpose.msra.mxu0 0.0
        %1286 = vmatprep.subr.mxu0 0.0
        %1287 = vmatpush1.xpose.msra.mxu0 0.0
        %1288 = vmatprep.subr.mxu0 0.0
        %1289 = vmatpush1.xpose.msra.mxu0 0.0
        %1290 = vmatprep.subr.mxu0 0.0
        %1291 = vmatpush1.xpose.msra.mxu0 0.0
        %1292 = vmatprep.subr.mxu0 0.0
        %1293 = vmatpush1.xpose.msra.mxu0 0.0
        %1294 = vmatprep.subr.mxu0 0.0
        %1295 = vmatpush1.xpose.msra.mxu0 0.0
        %1296 = vmatprep.subr.mxu0 0.0
        %1297 = vmatpush1.xpose.msra.mxu0 0.0
        %1298 = vmatprep.subr.mxu0 0.0
        %1299 = vmatpush1.xpose.msra.mxu0 0.0
        %1300 = vmatprep.subr.mxu0 0.0
        %1301 = vmatpush1.xpose.msra.mxu0 0.0
        %1302 = vmatprep.subr.mxu0 0.0
        %1303 = vmatpush1.xpose.msra.mxu0 0.0
        %1304 = vmatprep.subr.mxu0 0.0
        %1305 = vmatpush1.xpose.msra.mxu0 0.0
        %1306 = vmatprep.subr.mxu0 0.0
        %1307 = vmatpush1.xpose.msra.mxu0 0.0
        %1308 = vmatprep.subr.mxu0 0.0
        %1309 = vmatpush1.xpose.msra.mxu0 0.0
        %1310 = vmatprep.subr.mxu0 0.0
        %1311 = vmatpush1.xpose.msra.mxu0 0.0
        %1312 = vmatprep.subr.mxu0 0.0
        %1313 = vmatpush1.xpose.msra.mxu0 0.0
        %1314 = vmatprep.subr.mxu0 0.0
        %1315 = vmatpush1.xpose.msra.mxu0 0.0
        %1316 = vmatprep.subr.mxu0 0.0
        %1317 = vmatpush1.xpose.msra.mxu0 0.0
        %1318 = vmatprep.subr.mxu0 0.0
        %1319 = vmatpush1.xpose.msra.mxu0 0.0
        %1320 = vmatprep.subr.mxu0 0.0
        %1321 = vmatpush1.xpose.msra.mxu0 0.0
        %1322 = vmatprep.subr.mxu0 0.0
        %1323 = vmatpush1.xpose.msra.mxu0 0.0
        %1324 = vmatprep.subr.mxu0 0.0
        %1325 = vmatpush1.xpose.msra.mxu0 0.0
        %1326 = vmatprep.mubr.f32.mxu0 0.0
        %1327 = vmatmul.mubr.f32.gmra.mrb[0].mxu0 %v1251
        %v1328 = vpop.f32.mrb[0].mxu0
        %v1329 = vadd.f32 0.0, %v1328
        %v1330 = vpop.f32.mrb[0].mxu0
        %1331 = vmatprep.mubr.f32.mxu0 0.0
        %1332 = vmatmul.mubr.f32.gmra.mrb[0].mxu0 %v1254
        %v1333 = vpop.f32.mrb[0].mxu0
        %v1334 = vadd.f32 0.0, %v1333
        %v1335 = vpop.f32.mrb[0].mxu0
        %1336 = vdwg.mxu0
        %v1338 = vsel %vm791, %v708, 0
        %v1341 = vsel %vm791, %v758, 0
        %v1344 = vsel %vm791, %v1028, 0
        %v1347 = vsel %vm791, %v1029, 0
        %1349 = vmatprep.subr.mxu0 0.0
        %1350 = vmatpush1.xpose.msra.mxu0 %v1344
        %1351 = vmatprep.subr.mxu0 0.0
        %1352 = vmatpush1.xpose.msra.mxu0 %v1347
        %1353 = vmatprep.subr.mxu0 0.0
        %1354 = vmatpush1.xpose.msra.mxu0 0.0
        %1355 = vmatprep.subr.mxu0 0.0
        %1356 = vmatpush1.xpose.msra.mxu0 0.0
        %1357 = vmatprep.subr.mxu0 0.0
        %1358 = vmatpush1.xpose.msra.mxu0 0.0
        %1359 = vmatprep.subr.mxu0 0.0
        %1360 = vmatpush1.xpose.msra.mxu0 0.0
        %1361 = vmatprep.subr.mxu0 0.0
        %1362 = vmatpush1.xpose.msra.mxu0 0.0
        %1363 = vmatprep.subr.mxu0 0.0
        %1364 = vmatpush1.xpose.msra.mxu0 0.0
        %1365 = vmatprep.subr.mxu0 0.0
        %1366 = vmatpush1.xpose.msra.mxu0 0.0
        %1367 = vmatprep.subr.mxu0 0.0
        %1368 = vmatpush1.xpose.msra.mxu0 0.0
        %1369 = vmatprep.subr.mxu0 0.0
        %1370 = vmatpush1.xpose.msra.mxu0 0.0
        %1371 = vmatprep.subr.mxu0 0.0
        %1372 = vmatpush1.xpose.msra.mxu0 0.0
        %1373 = vmatprep.subr.mxu0 0.0
        %1374 = vmatpush1.xpose.msra.mxu0 0.0
        %1375 = vmatprep.subr.mxu0 0.0
        %1376 = vmatpush1.xpose.msra.mxu0 0.0
        %1377 = vmatprep.subr.mxu0 0.0
        %1378 = vmatpush1.xpose.msra.mxu0 0.0
        %1379 = vmatprep.subr.mxu0 0.0
        %1380 = vmatpush1.xpose.msra.mxu0 0.0
        %1381 = vmatprep.subr.mxu0 0.0
        %1382 = vmatpush1.xpose.msra.mxu0 0.0
        %1383 = vmatprep.subr.mxu0 0.0
        %1384 = vmatpush1.xpose.msra.mxu0 0.0
        %1385 = vmatprep.subr.mxu0 0.0
        %1386 = vmatpush1.xpose.msra.mxu0 0.0
        %1387 = vmatprep.subr.mxu0 0.0
        %1388 = vmatpush1.xpose.msra.mxu0 0.0
        %1389 = vmatprep.subr.mxu0 0.0
        %1390 = vmatpush1.xpose.msra.mxu0 0.0
        %1391 = vmatprep.subr.mxu0 0.0
        %1392 = vmatpush1.xpose.msra.mxu0 0.0
        %1393 = vmatprep.subr.mxu0 0.0
        %1394 = vmatpush1.xpose.msra.mxu0 0.0
        %1395 = vmatprep.subr.mxu0 0.0
        %1396 = vmatpush1.xpose.msra.mxu0 0.0
        %1397 = vmatprep.subr.mxu0 0.0
        %1398 = vmatpush1.xpose.msra.mxu0 0.0
        %1399 = vmatprep.subr.mxu0 0.0
        %1400 = vmatpush1.xpose.msra.mxu0 0.0
        %1401 = vmatprep.subr.mxu0 0.0
        %1402 = vmatpush1.xpose.msra.mxu0 0.0
        %1403 = vmatprep.subr.mxu0 0.0
        %1404 = vmatpush1.xpose.msra.mxu0 0.0
        %1405 = vmatprep.subr.mxu0 0.0
        %1406 = vmatpush1.xpose.msra.mxu0 0.0
        %1407 = vmatprep.subr.mxu0 0.0
        %1408 = vmatpush1.xpose.msra.mxu0 0.0
        %1409 = vmatprep.subr.mxu0 0.0
        %1410 = vmatpush1.xpose.msra.mxu0 0.0
        %1411 = vmatprep.subr.mxu0 0.0
        %1412 = vmatpush1.xpose.msra.mxu0 0.0
        %1413 = vmatprep.mubr.f32.mxu0 0.0
        %1414 = vmatmul.mubr.f32.gmra.mrb[0].mxu0 %v1338
        %v1415 = vpop.f32.mrb[0].mxu0
        %v1416 = vadd.f32 0.0, %v1415
        %v1417 = vpop.f32.mrb[0].mxu0
        %1418 = vmatprep.mubr.f32.mxu0 0.0
        %1419 = vmatmul.mubr.f32.gmra.mrb[0].mxu0 %v1341
        %v1420 = vpop.f32.mrb[0].mxu0
        %v1421 = vadd.f32 0.0, %v1420
        %v1422 = vpop.f32.mrb[0].mxu0
        %1423 = vdwg.mxu0
        %v1424 = vld [vmem:[%s3] sm:$0xf]
        %v1425 = vcombine.high %v1329, 0.0
        %v1427 = vunpack.c.l.s4 1983009808
        %v1428 = vunpack.c.0.s8 %v1427
        %v1429 = vlaneseq
        %v1430 = vshrl.u32 %v1429, 7
        %v1431 = vsub.s32 %v1428, %v1430
        %v1432 = vrot.slane %v1329, %v1431
        %v1434 = vunpack.c.l.s4 1983009808
        %v1435 = vunpack.c.0.s8 %v1434
        %v1436 = vlaneseq
        %v1437 = vshrl.u32 %v1436, 7
        %v1438 = vsub.s32 %v1435, %v1437
        %v1439 = vrot.slane %v1425, %v1438
        %v1440 = vcombine.high %v1416, 0.0
        %v1442 = vunpack.c.l.s4 1983009808
        %v1443 = vunpack.c.0.s8 %v1442
        %v1444 = vlaneseq
        %v1445 = vshrl.u32 %v1444, 7
        %v1446 = vsub.s32 %v1443, %v1445
        %v1447 = vrot.slane %v1416, %v1446
        %v1449 = vunpack.c.l.s4 1983009808
        %v1450 = vunpack.c.0.s8 %v1449
        %v1451 = vlaneseq
        %v1452 = vshrl.u32 %v1451, 7
        %v1453 = vsub.s32 %v1450, %v1452
        %v1454 = vrot.slane %v1440, %v1453
        %v1455 = vcombine.low %v1432, %v1447
        %v1456 = vcombine.high %v1432, %v1447
        %v1458 = vunpack.c.l.s4 1934713408
        %v1459 = vunpack.c.0.s8 %v1458
        %v1460 = vlaneseq
        %v1461 = vshrl.u32 %v1460, 7
        %v1462 = vsub.s32 %v1459, %v1461
        %v1463 = vrot.slane %v1455, %v1462
        %v1465 = vunpack.c.l.s4 1934713408
        %v1466 = vunpack.c.0.s8 %v1465
        %v1467 = vlaneseq
        %v1468 = vshrl.u32 %v1467, 7
        %v1469 = vsub.s32 %v1466, %v1468
        %v1470 = vrot.slane %v1456, %v1469
        %v1471 = vcombine.low %v1439, %v1454
        %v1472 = vcombine.high %v1439, %v1454
        %v1474 = vunpack.c.l.s4 1934713408
        %v1475 = vunpack.c.0.s8 %v1474
        %v1476 = vlaneseq
        %v1477 = vshrl.u32 %v1476, 7
        %v1478 = vsub.s32 %v1475, %v1477
        %v1479 = vrot.slane %v1471, %v1478
        %v1481 = vunpack.c.l.s4 1934713408
        %v1482 = vunpack.c.0.s8 %v1481
        %v1483 = vlaneseq
        %v1484 = vshrl.u32 %v1483, 7
        %v1485 = vsub.s32 %v1482, %v1484
        %v1486 = vrot.slane %v1472, %v1485
        %v1487 = vcombine.high %v1463, 0.0
        %v1488 = vcombine.high %v1470, 0.0
        %v1489 = vcombine.high %v1479, 0.0
        %v1490 = vcombine.high %v1486, 0.0
        %v1491 = vcombine.high %v1334, 0.0
        %v1493 = vunpack.c.l.s4 1983009808
        %v1494 = vunpack.c.0.s8 %v1493
        %v1495 = vlaneseq
        %v1496 = vshrl.u32 %v1495, 7
        %v1497 = vsub.s32 %v1494, %v1496
        %v1498 = vrot.slane %v1334, %v1497
        %v1500 = vunpack.c.l.s4 1983009808
        %v1501 = vunpack.c.0.s8 %v1500
        %v1502 = vlaneseq
        %v1503 = vshrl.u32 %v1502, 7
        %v1504 = vsub.s32 %v1501, %v1503
        %v1505 = vrot.slane %v1491, %v1504
        %v1506 = vcombine.high %v1421, 0.0
        %v1508 = vunpack.c.l.s4 1983009808
        %v1509 = vunpack.c.0.s8 %v1508
        %v1510 = vlaneseq
        %v1511 = vshrl.u32 %v1510, 7
        %v1512 = vsub.s32 %v1509, %v1511
        %v1513 = vrot.slane %v1421, %v1512
        %v1515 = vunpack.c.l.s4 1983009808
        %v1516 = vunpack.c.0.s8 %v1515
        %v1517 = vlaneseq
        %v1518 = vshrl.u32 %v1517, 7
        %v1519 = vsub.s32 %v1516, %v1518
        %v1520 = vrot.slane %v1506, %v1519
        %v1521 = vcombine.low %v1498, %v1513
        %v1522 = vcombine.high %v1498, %v1513
        %v1524 = vunpack.c.l.s4 1934713408
        %v1525 = vunpack.c.0.s8 %v1524
        %v1526 = vlaneseq
        %v1527 = vshrl.u32 %v1526, 7
        %v1528 = vsub.s32 %v1525, %v1527
        %v1529 = vrot.slane %v1521, %v1528
        %v1531 = vunpack.c.l.s4 1934713408
        %v1532 = vunpack.c.0.s8 %v1531
        %v1533 = vlaneseq
        %v1534 = vshrl.u32 %v1533, 7
        %v1535 = vsub.s32 %v1532, %v1534
        %v1536 = vrot.slane %v1522, %v1535
        %v1537 = vcombine.low %v1505, %v1520
        %v1538 = vcombine.high %v1505, %v1520
        %v1540 = vunpack.c.l.s4 1934713408
        %v1541 = vunpack.c.0.s8 %v1540
        %v1542 = vlaneseq
        %v1543 = vshrl.u32 %v1542, 7
        %v1544 = vsub.s32 %v1541, %v1543
        %v1545 = vrot.slane %v1537, %v1544
        %v1547 = vunpack.c.l.s4 1934713408
        %v1548 = vunpack.c.0.s8 %v1547
        %v1549 = vlaneseq
        %v1550 = vshrl.u32 %v1549, 7
        %v1551 = vsub.s32 %v1548, %v1550
        %v1552 = vrot.slane %v1538, %v1551
        %v1553 = vcombine.high %v1529, 0.0
        %v1554 = vcombine.high %v1536, 0.0
        %v1555 = vcombine.high %v1545, 0.0
        %v1556 = vcombine.high %v1552, 0.0
        %1558 = vrot.lane.b32.xlu0 %v1487, 16
        %v1559 = vpop.permute.xlu0 %1558
        %1562 = vrot.lane.b32.xlu0 %v1470, 32
        %v1563 = vpop.permute.xlu0 %1562
        %1566 = vrot.lane.b32.xlu0 %v1488, 48
        %v1567 = vpop.permute.xlu0 %1566
        %1570 = vrot.lane.b32.xlu0 %v1479, 64
        %v1571 = vpop.permute.xlu0 %1570
        %1574 = vrot.lane.b32.xlu0 %v1489, 80
        %v1575 = vpop.permute.xlu0 %1574
        %1578 = vrot.lane.b32.xlu0 %v1486, 96
        %v1579 = vpop.permute.xlu0 %1578
        %1582 = vrot.lane.b32.xlu0 %v1490, 112
        %v1583 = vpop.permute.xlu0 %1582
        %1586 = vrot.lane.b32.xlu0 %v1553, 16
        %v1587 = vpop.permute.xlu0 %1586
        %1590 = vrot.lane.b32.xlu0 %v1536, 32
        %v1591 = vpop.permute.xlu0 %1590
        %1594 = vrot.lane.b32.xlu0 %v1554, 48
        %v1595 = vpop.permute.xlu0 %1594
        %1598 = vrot.lane.b32.xlu0 %v1545, 64
        %v1599 = vpop.permute.xlu0 %1598
        %1602 = vrot.lane.b32.xlu0 %v1555, 80
        %v1603 = vpop.permute.xlu0 %1602
        %1606 = vrot.lane.b32.xlu0 %v1552, 96
        %v1607 = vpop.permute.xlu0 %1606
        %1610 = vrot.lane.b32.xlu0 %v1556, 112
        %v1611 = vpop.permute.xlu0 %1610
        %v1613 = vsel %vm791, %v1463, %v1559
        %v1614 = vsel %vm1219, %v1613, %v1563
        %v1615 = vsel %vm1221, %v1614, %v1567
        %v1616 = vsel %vm1223, %v1615, %v1571
        %v1617 = vsel %vm1225, %v1616, %v1575
        %v1618 = vsel %vm1227, %v1617, %v1579
        %v1619 = vsel %vm1229, %v1618, %v1583
        %v1620 = vsel %vm791, %v1529, %v1587
        %v1621 = vsel %vm1219, %v1620, %v1591
        %v1622 = vsel %vm1221, %v1621, %v1595
        %v1623 = vsel %vm1223, %v1622, %v1599
        %v1624 = vsel %vm1225, %v1623, %v1603
        %v1625 = vsel %vm1227, %v1624, %v1607
        %v1626 = vsel %vm1229, %v1625, %v1611
        %v1627 = vld [vmem:[%s4] sm:$0xf]
        %1629 = vset.pattern.permute.xlu0 0
        %1630 = vperm.xlu0 %1629, %v1627
        %v1631 = vpop.permute.xlu0 %1630
        %vm1633 = vcmask 15360
        %v1635 = vsel %vm1633, %v1424, 0
        %vm1637 = vcmask 1041408
        %v1639 = vsel %vm1637, %v1619, 0
        %v1642 = vsel %vm1637, %v1626, 0
        %1644 = vmatprep.subr.mxu0 %v1642
        %1645 = vmatpush1.msra.mxu0 %v1639
        %1646 = vmatprep.subr.mxu0 0.0
        %1647 = vmatpush1.msra.mxu0 0.0
        %1648 = vmatprep.subr.mxu0 0.0
        %1649 = vmatpush1.msra.mxu0 0.0
        %1650 = vmatprep.subr.mxu0 0.0
        %1651 = vmatpush1.msra.mxu0 0.0
        %1652 = vmatprep.subr.mxu0 0.0
        %1653 = vmatpush1.msra.mxu0 0.0
        %1654 = vmatprep.subr.mxu0 0.0
        %1655 = vmatpush1.msra.mxu0 0.0
        %1656 = vmatprep.subr.mxu0 0.0
        %1657 = vmatpush1.msra.mxu0 0.0
        %1658 = vmatprep.subr.mxu0 0.0
        %1659 = vmatpush1.msra.mxu0 0.0
        %1660 = vmatprep.subr.mxu0 0.0
        %1661 = vmatpush1.msra.mxu0 0.0
        %1662 = vmatprep.subr.mxu0 0.0
        %1663 = vmatpush1.msra.mxu0 0.0
        %1664 = vmatprep.subr.mxu0 0.0
        %1665 = vmatpush1.msra.mxu0 0.0
        %1666 = vmatprep.subr.mxu0 0.0
        %1667 = vmatpush1.msra.mxu0 0.0
        %1668 = vmatprep.subr.mxu0 0.0
        %1669 = vmatpush1.msra.mxu0 0.0
        %1670 = vmatprep.subr.mxu0 0.0
        %1671 = vmatpush1.msra.mxu0 0.0
        %1672 = vmatprep.subr.mxu0 0.0
        %1673 = vmatpush1.msra.mxu0 0.0
        %1674 = vmatprep.subr.mxu0 0.0
        %1675 = vmatpush1.msra.mxu0 0.0
        %1676 = vmatprep.subr.mxu0 0.0
        %1677 = vmatpush1.msra.mxu0 0.0
        %1678 = vmatprep.subr.mxu0 0.0
        %1679 = vmatpush1.msra.mxu0 0.0
        %1680 = vmatprep.subr.mxu0 0.0
        %1681 = vmatpush1.msra.mxu0 0.0
        %1682 = vmatprep.subr.mxu0 0.0
        %1683 = vmatpush1.msra.mxu0 0.0
        %1684 = vmatprep.subr.mxu0 0.0
        %1685 = vmatpush1.msra.mxu0 0.0
        %1686 = vmatprep.subr.mxu0 0.0
        %1687 = vmatpush1.msra.mxu0 0.0
        %1688 = vmatprep.subr.mxu0 0.0
        %1689 = vmatpush1.msra.mxu0 0.0
        %1690 = vmatprep.subr.mxu0 0.0
        %1691 = vmatpush1.msra.mxu0 0.0
        %1692 = vmatprep.subr.mxu0 0.0
        %1693 = vmatpush1.msra.mxu0 0.0
        %1694 = vmatprep.subr.mxu0 0.0
        %1695 = vmatpush1.msra.mxu0 0.0
        %1696 = vmatprep.subr.mxu0 0.0
        %1697 = vmatpush1.msra.mxu0 0.0
        %1698 = vmatprep.subr.mxu0 0.0
        %1699 = vmatpush1.msra.mxu0 0.0
        %1700 = vmatprep.subr.mxu0 0.0
        %1701 = vmatpush1.msra.mxu0 0.0
        %1702 = vmatprep.subr.mxu0 0.0
        %1703 = vmatpush1.msra.mxu0 0.0
        %1704 = vmatprep.subr.mxu0 0.0
        %1705 = vmatpush1.msra.mxu0 0.0
        %1706 = vmatprep.subr.mxu0 0.0
        %1707 = vmatpush1.msra.mxu0 0.0
        %1708 = vmatprep.mubr.f32.mxu0 0.0
        %1709 = vmatmul.mubr.f32.gmra.mrb[0].mxu0 %v1635
        %v1710 = vpop.f32.mrb[0].mxu0
        %v1711 = vadd.f32 %v1631, %v1710
        %v1712 = vpop.f32.mrb[0].mxu0
        %v1713 = vadd.f32 %v1631, %v1712
        %1714 = vdwg.mxu0
        %v1717 = vcombine.low %v1711, %v1713
        %1719 = vst [vmem:[%s248] sm:$0xff] %v1717
        %s1720 = sand.u32 %s142, 1
        %s1721 = scalar_lea.sflag [#allocation3], %s1720
        %s1722 = sand.u32 %s142, 1
        %s1723 = smul.addr %s1722, 8
        %s1724 = scalar_lea.vmem [#allocation2], %s1723
        %s1725 = sand.u32 %s168, 1
        %s1726 = scalar_lea.sflag [#allocation5], %s1725
        %s1727 = sand.u32 %s168, 1
        %s1728 = smul.addr %s1727, 4
        %s1729 = scalar_lea.vmem [#allocation4], %s1728
        // Predicated region
        $region41: #{tpu_custom_call.1} parent=39 // pred_check
          %p1730 = pneg %p152
        $region42: #{tpu_custom_call.1} parent=39 // pred_check_branch
          %1732 = sbr.rel (%p1730) target = $region44
        $region43: #{tpu_custom_call.1} parent=39 // pred_region
          %s1734 = ssub.s32 128, 128
          %1735 = vsyncadd %s1721, %s1734
          %s1736 = smul.addr %s24, 2
          %s1737 = smul.addr %s1736, 64
          %s1738 = scalar_lea.hbm %s5, %s1737
          %s1740 = sshll.u32 %s1724, 4
          %s1741 = int_to_ptr.vmem [resolvable:$true] %s1740
          %1743 = dma.vmem_to_hbm [thread:$0]  %s1741, 128, %s1738, %s1721
        $region44: #{tpu_custom_call.1} parent=39 // pred_fallthru
          _
        // Predicated region
        $region45: #{tpu_custom_call.1} parent=39 // pred_check
          %p1744 = pneg %p178
        $region46: #{tpu_custom_call.1} parent=39 // pred_check_branch
          %1746 = sbr.rel (%p1744) target = $region48
        $region47: #{tpu_custom_call.1} parent=39 // pred_region
          %s1748 = ssub.s32 64, 64
          %1749 = vsyncadd %s1726, %s1748
          %s1750 = smul.addr %s24, 2
          %s1751 = smul.addr %s1750, 32
          %s1752 = scalar_lea.hbm %s6, %s1751
          %s1754 = sshll.u32 %s1729, 4
          %s1755 = int_to_ptr.vmem [resolvable:$true] %s1754
          %1757 = dma.vmem_to_hbm [thread:$0]  %s1755, 64, %s1752, %s1726
        $region48: #{tpu_custom_call.1} parent=39 // pred_fallthru
          _
      $region40: #{tpu_custom_call.1} parent=5 // pred_fallthru
        _
      %p1758 = scmp.le.s32.totalorder 2, %s19
      // Predicated region
      $region49: #{tpu_custom_call.1} parent=5 // pred_check
        %p1759 = pneg %p1758
      $region50: #{tpu_custom_call.1} parent=5 // pred_check_branch
        %1761 = sbr.rel (%p1759) target = $region52
      $region51: #{tpu_custom_call.1} parent=5 // pred_region
        %s1762 = ssub.s32 %s19, 2
        // Predicated region
        $region53: #{tpu_custom_call.1} parent=51 // pred_check
          %p1763 = pneg %p158
        $region54: #{tpu_custom_call.1} parent=51 // pred_check_branch
          %1765 = sbr.rel (%p1763) target = $region56
        $region55: #{tpu_custom_call.1} parent=51 // pred_region
          %s1766 = sand.u32 %s143, 1
          %s1767 = scalar_lea.sflag [#allocation3], %s1766
          %s1768 = sand.u32 %s143, 1
          %s1769 = smul.addr %s1768, 8
          %s1770 = scalar_lea.vmem [#allocation2], %s1769
          %1771 = dma.done %s1767, 128
        $region56: #{tpu_custom_call.1} parent=51 // pred_fallthru
          _
        // Predicated region
        $region57: #{tpu_custom_call.1} parent=51 // pred_check
          %p1772 = pneg %p184
        $region58: #{tpu_custom_call.1} parent=51 // pred_check_branch
          %1774 = sbr.rel (%p1772) target = $region60
        $region59: #{tpu_custom_call.1} parent=51 // pred_region
          %s1775 = sand.u32 %s169, 1
          %s1776 = scalar_lea.sflag [#allocation5], %s1775
          %s1777 = sand.u32 %s169, 1
          %s1778 = smul.addr %s1777, 4
          %s1779 = scalar_lea.vmem [#allocation4], %s1778
          %1780 = dma.done %s1776, 64
        $region60: #{tpu_custom_call.1} parent=51 // pred_fallthru
          _
      $region52: #{tpu_custom_call.1} parent=5 // pred_fallthru
        _
    $region6: #{tpu_custom_call.1} parent=1 // loop_footer
      %s23 = sadd.s32 1, %s19
    $region7: #{tpu_custom_call.1} parent=1 // loop_footer_branch
      %18 = sbr.rel target = $region3
    $region8: #{tpu_custom_call.1} parent=1 // loop_exit
      _
    %1781 = vsyncpa [#allocation3], 1
    %s1782 = scalar_lea.sflag [#allocation3], 1
    %1783 = vsyncpa %s1782, 1
    %1784 = vsyncpa [#allocation5], 1
    %s1785 = scalar_lea.sflag [#allocation5], 1
    %1786 = vsyncpa %s1785, 1

</llo_original>
